<compile_context>
chip_gen: v7x
topology: tpu7x:2x2x1
jax: 0.10.0
libtpu: 0.0.40
codegen_flags: <defaults>
</compile_context>

<pallas_src>
import functools

import jax
import jax.numpy as jnp
from jax.experimental import pallas as pl
from jax.experimental.pallas import tpu as pltpu


# ------------------------------ fused kernel --------------------------------


def _dab_fused_kernel(x_ref,        # (1, H, W*C)   packed input (residual)
                      a_ref,        # (3, W*C, W*hid)  init 3x3 conv, banded per ky, BN-scale folded
                      bi_ref,       # (1, W*hid)       init conv bias (packed)
                      th_ref,       # (2, 3, W*hid)    (3,1) depthwise taps [left,right], scale folded
                      bh_ref,       # (2, W*hid)       (3,1) depthwise bias
                      dwm_ref,      # (2, W*hid, W*hid) (1,3) depthwise as banded lane-mix matmul
                      bw_ref,       # (2, W*hid)       (1,3) depthwise bias
                      wl_ref,       # (W*hid, W*C)     1x1 conv, block-diag over W, scale folded
                      bl_ref,       # (1, W*C)         1x1 conv bias (packed)
                      o_ref,        # (1, H, W*C)
                      xpad_ref,     # VMEM (H+2,   W*C)    H-padded packed input
                      hpad_ref,     # VMEM (H+2*d, W*hid)  H-padded packed hidden
                      *, dilation):
    H, WC = o_ref.shape[1], o_ref.shape[2]
    WH = hpad_ref.shape[1]
    d = dilation

    x = x_ref[0]                                               # (H, WC), lane-dense

    # ---- in-kernel zero padding: halo rows ONLY (interiors fully rewritten) ----
    xpad_ref[0:1, :] = jnp.zeros((1, WC), jnp.float32)
    xpad_ref[H + 1:H + 2, :] = jnp.zeros((1, WC), jnp.float32)
    xpad_ref[1:H + 1, :] = x

    # ---- init_conv: 3x3 dense conv C->hid as 3 banded matmuls (one per ky tap) ----
    # A[ky][ws*C+ci, w*hid+co] already encodes the kx taps + zero W-padding + BN scale.
    h = jnp.dot(xpad_ref[0:H, :], a_ref[0], preferred_element_type=jnp.float32)
    h = h + jnp.dot(xpad_ref[1:H + 1, :], a_ref[1], preferred_element_type=jnp.float32)
    h = h + jnp.dot(xpad_ref[2:H + 2, :], a_ref[2], preferred_element_type=jnp.float32)
    h = jnp.maximum(h + bi_ref[...], 0.0)                      # (H, WH)

    hpad_ref[0:d, :] = jnp.zeros((d, WH), jnp.float32)
    hpad_ref[d + H:2 * d + H, :] = jnp.zeros((d, WH), jnp.float32)
    hpad_ref[d:d + H, :] = h

    th = th_ref[...]                                           # (2, 3, WH)
    bh = bh_ref[...]                                           # (2, WH)
    bw = bw_ref[...]                                           # (2, WH)

    def branch(idx, dil):
        # depthwise (3,1) along H: 3 row-shifted (major-axis) slices * packed taps.
        acc = hpad_ref[d - dil:d - dil + H, :] * th[idx, 0]
        acc = acc + hpad_ref[d:d + H, :] * th[idx, 1]
        acc = acc + hpad_ref[d + dil:d + dil + H, :] * th[idx, 2]
        acc = jnp.maximum(acc + bh[idx], 0.0)
        # depthwise (1,3) along W: banded lane-mixing matmul (keeps lanes dense,
        # runs on the MXU, avoids misaligned W-slices entirely).
        acc = jnp.dot(acc, dwm_ref[idx], preferred_element_type=jnp.float32)
        return jnp.maximum(acc + bw[idx], 0.0)

    mid = branch(0, 1) + branch(1, d)                          # x_left + x_right, (H, WH)

    # ---- last_conv: 1x1 conv hid->C as a block-diagonal lane matmul, + residual ----
    out = jnp.dot(mid, wl_ref[...], preferred_element_type=jnp.float32)   # (H, WC)
    out = jnp.maximum(out + bl_ref[...], 0.0)
    o_ref[0] = (out + x).astype(o_ref.dtype)


# ------------------------------ wrapper --------------------------------------


def _full_spec(arr):
    nd = arr.ndim
    return pl.BlockSpec(arr.shape, lambda n, _nd=nd: (0,) * _nd)


@functools.partial(jax.jit, static_argnums=2)
def dab_module_forward(x_nchw, params, dilation):
    """Pallas-backed DABModule forward.  x_nchw: (N, C, H, W) float32."""
    N, C, H, W = x_nchw.shape
    assert C % 2 == 0, "channels must be a multiple of 2"
    hid = C // 2
    d = int(dilation)
    assert d >= 1, "dilation must be >= 1"
    f32 = jnp.float32

    # One repack: NCHW -> NHWC -> lane-packed (N, H, W*C).
    x = jnp.transpose(x_nchw, (0, 2, 3, 1)).reshape(N, H, W * C)

    # ------------- fold BN scales into weights, build packed/banded weights ------
    s_init = params['init_scale'].reshape(-1)
    b_init = params['init_bias'].reshape(-1)
    s_last = params['last_scale'].reshape(-1)
    b_last = params['last_bias'].reshape(-1)

    ws = jnp.arange(W)[:, None]          # source w
    wd = jnp.arange(W)[None, :]          # destination w
    delta = ws - wd                      # (W, W)

    # init 3x3 conv -> 3 banded matrices A[ky]: (W*C, W*hid), kx taps + W-padding folded.
    w3 = params['init_w'].reshape(3, 3, C, hid)                    # (ky, kx, ci, co)
    valid3 = (jnp.abs(delta) <= 1).astype(f32)
    kx_idx = jnp.clip(delta + 1, 0, 2)
    tap3 = w3[:, kx_idx, :, :] * valid3[None, :, :, None, None]    # (3, Ws, Wd, C, hid)
    A = tap3.transpose(0, 1, 3, 2, 4).reshape(3, W * C, W * hid)
    A = A * jnp.tile(s_init, W)[None, None, :]                     # fold BN scale
    bias_init = jnp.tile(b_init, W).reshape(1, W * hid)

    def h_taps(w1, s1):            # (3, hid) -> (3, W*hid), BN scale folded
        return jnp.tile(w1 * s1.reshape(1, -1), (1, W))

    taps_h = jnp.stack([h_taps(params['l1_w'], params['l1_scale'].reshape(-1)),
                        h_taps(params['r1_w'], params['r1_scale'].reshape(-1))])
    bias_h = jnp.stack([jnp.tile(params['l1_bias'].reshape(-1), W),
                        jnp.tile(params['r1_bias'].reshape(-1), W)])

    def band_w(w2, s2, dil):       # (1,3) depthwise -> banded (W*hid, W*hid) lane-mix
        coeff = jnp.zeros((W, W, hid), f32)
        for k in range(3):
            sel = (delta == (k - 1) * dil).astype(f32)             # source = dest + (k-1)*dil
            coeff = coeff + sel[:, :, None] * (w2[k] * s2)[None, None, :]
        Dm = coeff[:, :, :, None] * jnp.eye(hid, dtype=f32)[None, None, :, :]
        return Dm.transpose(0, 2, 1, 3).reshape(W * hid, W * hid)

    Dw = jnp.stack([band_w(params['l2_w'], params['l2_scale'].reshape(-1), 1),
                    band_w(params['r2_w'], params['r2_scale'].reshape(-1), d)])
    bias_w = jnp.stack([jnp.tile(params['l2_bias'].reshape(-1), W),
                        jnp.tile(params['r2_bias'].reshape(-1), W)])

    # last 1x1 conv -> block-diagonal (W*hid, W*C), BN scale folded.
    B = jnp.einsum('ij,kl->ikjl', jnp.eye(W, dtype=f32),
                   params['last_w'] * s_last[None, :]).reshape(W * hid, W * C)
    bias_last = jnp.tile(b_last, W).reshape(1, W * C)

    weights = (A, bias_init, taps_h, bias_h, Dw, bias_w, B, bias_last)

    kern = functools.partial(_dab_fused_kernel, dilation=d)
    out = pl.pallas_call(
        kern,
        out_shape=jax.ShapeDtypeStruct((N, H, W * C), x.dtype),
        grid=(N,),
        in_specs=[pl.BlockSpec((1, H, W * C), lambda n: (n, 0, 0))]
                 + [_full_spec(w) for w in weights],
        out_specs=pl.BlockSpec((1, H, W * C), lambda n: (n, 0, 0)),
        scratch_shapes=[
            pltpu.VMEM((H + 2, W * C), jnp.float32),       # H-padded packed input
            pltpu.VMEM((H + 2 * d, W * hid), jnp.float32), # H-padded packed hidden
        ],
        input_output_aliases={0: 0},                        # reuse residual's HBM buffer
        # Footprint is ~0.5 MiB; the default scoped-VMEM limit is ample on all chips.
        compiler_params=pltpu.CompilerParams(
            dimension_semantics=("parallel",)),
    )(x, *weights)

    return jnp.transpose(out.reshape(N, H, W, C), (0, 3, 1, 2))    # packed -> NCHW


# ------------------------------ deterministic params -------------------------


def _fold_bn(key, cout, eps=1e-5):
    kg, kb, km, kv = jax.random.split(key, 4)
    gamma = jax.random.uniform(kg, (cout,), jnp.float32, 0.5, 1.5)
    beta = jax.random.normal(kb, (cout,), jnp.float32) * 0.1
    mean = jax.random.normal(km, (cout,), jnp.float32) * 0.1
    var = jax.random.uniform(kv, (cout,), jnp.float32, 0.5, 1.5)
    scale = gamma / jnp.sqrt(var + eps)
    bias = beta - mean * scale
    return scale.reshape(1, cout), bias.reshape(1, cout)


def init_params(key, channels):
    hid = channels // 2
    keys = jax.random.split(key, 12)
    p = {}
    p['init_w'] = jax.random.normal(keys[0], (9, channels, hid), jnp.float32) * 0.1
    p['init_scale'], p['init_bias'] = _fold_bn(keys[1], hid)
    p['l1_w'] = jax.random.normal(keys[2], (3, hid), jnp.float32) * 0.3
    p['l1_scale'], p['l1_bias'] = _fold_bn(keys[3], hid)
    p['l2_w'] = jax.random.normal(keys[4], (3, hid), jnp.float32) * 0.3
    p['l2_scale'], p['l2_bias'] = _fold_bn(keys[5], hid)
    p['r1_w'] = jax.random.normal(keys[6], (3, hid), jnp.float32) * 0.3
    p['r1_scale'], p['r1_bias'] = _fold_bn(keys[7], hid)
    p['r2_w'] = jax.random.normal(keys[8], (3, hid), jnp.float32) * 0.3
    p['r2_scale'], p['r2_bias'] = _fold_bn(keys[9], hid)
    p['last_w'] = jax.random.normal(keys[10], (hid, channels), jnp.float32) * 0.1
    p['last_scale'], p['last_bias'] = _fold_bn(keys[11], channels)
    return p


# ------------------------------ pure-JAX reference ---------------------------


def ref_forward(x_nchw, params, dilation):
    x = jnp.transpose(x_nchw, (0, 2, 3, 1))
    residual = x
    dn = ('NHWC', 'HWIO', 'NHWC')

    def cba(v, w_hwio, scale, bias, padding, rhs_dilation=(1, 1), groups=1):
        y = jax.lax.conv_general_dilated(
            v, w_hwio, (1, 1), padding, rhs_dilation=rhs_dilation,
            dimension_numbers=dn, feature_group_count=groups,
            precision=jax.lax.Precision.HIGHEST)
        return jnp.maximum(y * scale.reshape(1, 1, 1, -1) + bias.reshape(1, 1, 1, -1), 0.0)

    C = x.shape[-1]
    hid = C // 2
    d = dilation
    h = cba(x, params['init_w'].reshape(3, 3, C, hid), params['init_scale'],
            params['init_bias'], ((1, 1), (1, 1)))
    l = cba(h, params['l1_w'].reshape(3, 1, 1, hid), params['l1_scale'],
            params['l1_bias'], ((1, 1), (0, 0)), (1, 1), hid)
    l = cba(l, params['l2_w'].reshape(1, 3, 1, hid), params['l2_scale'],
            params['l2_bias'], ((0, 0), (1, 1)), (1, 1), hid)
    r = cba(h, params['r1_w'].reshape(3, 1, 1, hid), params['r1_scale'],
            params['r1_bias'], ((d, d), (0, 0)), (d, 1), hid)
    r = cba(r, params['r2_w'].reshape(1, 3, 1, hid), params['r2_scale'],
            params['r2_bias'], ((0, 0), (d, d)), (1, d), hid)
    out = cba(l + r, params['last_w'].reshape(1, 1, hid, C), params['last_scale'],
              params['last_bias'], ((0, 0), (0, 0)))
    out = out + residual
    return jnp.transpose(out, (0, 3, 1, 2))


# ------------------------------ main ------------------------------------------


if __name__ == "__main__":
    channels, dilation = 8, 2     # channels must be a multiple of 2; W*C = 128 lanes
    N, H, W = 2, 16, 16

    key = jax.random.PRNGKey(0)
    kx, kp = jax.random.split(key)
    x_nchw = jax.random.normal(kx, (N, channels, H, W), jnp.float32)
    params = init_params(kp, channels)

    out = jax.block_until_ready(dab_module_forward(x_nchw, params, dilation))
    ref = jax.block_until_ready(ref_forward(x_nchw, params, dilation))

    assert out.shape == (N, channels, H, W)
    # Kept at 5e-3 (not tighter) to stay robust to MXU multi-pass f32 accumulation
    # order while still catching any layout / weight-folding regression.
    assert jnp.allclose(out, ref, atol=5e-3, rtol=5e-3), "Pallas output mismatch vs reference"

    print("KERNEL_OK")
</pallas_src>

<mosaic_0001>
module attributes {stable_mosaic.version = 11 : i64} {
  func.func @_dab_fused_kernel(%arg0: i32, %arg1: memref<1x16x128xf32, #tpu.memory_space<vmem>>, %arg2: memref<3x128x64xf32, #tpu.memory_space<vmem>>, %arg3: memref<1x64xf32, #tpu.memory_space<vmem>>, %arg4: memref<2x3x64xf32, #tpu.memory_space<vmem>>, %arg5: memref<2x64xf32, #tpu.memory_space<vmem>>, %arg6: memref<2x64x64xf32, #tpu.memory_space<vmem>>, %arg7: memref<2x64xf32, #tpu.memory_space<vmem>>, %arg8: memref<64x128xf32, #tpu.memory_space<vmem>>, %arg9: memref<1x128xf32, #tpu.memory_space<vmem>>, %arg10: memref<1x16x128xf32, #tpu.memory_space<vmem>>, %arg11: memref<18x128xf32, #tpu.memory_space<vmem>>, %arg12: memref<20x64xf32, #tpu.memory_space<vmem>>) attributes {dimension_semantics = [#tpu.dimension_semantics<parallel>], iteration_bounds = array<i64: 2>, scalar_prefetch = 0 : i64, scratch_operands = 2 : i64, tpu.core_type = #tpu.core_type<tc>, window_params = [{transform_indices = @transform_0, window_bounds = array<i64: 1, 16, 128>}, {pipeline_mode = #tpu.pipeline_mode<synchronous>, transform_indices = @transform_1, window_bounds = array<i64: 3, 128, 64>}, {pipeline_mode = #tpu.pipeline_mode<synchronous>, transform_indices = @transform_2, window_bounds = array<i64: 1, 64>}, {pipeline_mode = #tpu.pipeline_mode<synchronous>, transform_indices = @transform_3, window_bounds = array<i64: 2, 3, 64>}, {pipeline_mode = #tpu.pipeline_mode<synchronous>, transform_indices = @transform_4, window_bounds = array<i64: 2, 64>}, {pipeline_mode = #tpu.pipeline_mode<synchronous>, transform_indices = @transform_5, window_bounds = array<i64: 2, 64, 64>}, {pipeline_mode = #tpu.pipeline_mode<synchronous>, transform_indices = @transform_6, window_bounds = array<i64: 2, 64>}, {pipeline_mode = #tpu.pipeline_mode<synchronous>, transform_indices = @transform_7, window_bounds = array<i64: 64, 128>}, {pipeline_mode = #tpu.pipeline_mode<synchronous>, transform_indices = @transform_8, window_bounds = array<i64: 1, 128>}, {transform_indices = @transform_9, window_bounds = array<i64: 1, 16, 128>}]} {
    %c0 = arith.constant 0 : index
    %c0_0 = arith.constant 0 : index
    %c0_1 = arith.constant 0 : index
    %0 = vector.load %arg1[%c0, %c0_0, %c0_1] : memref<1x16x128xf32, #tpu.memory_space<vmem>>, vector<1x16x128xf32>
    %1 = vector.shape_cast %0 : vector<1x16x128xf32> to vector<16x128xf32>
    %cst = arith.constant 0.000000e+00 : f32
    %2 = vector.broadcast %cst : f32 to vector<1x128xf32>
    %c0_2 = arith.constant 0 : index
    %c0_3 = arith.constant 0 : index
    %3 = vector.load %arg11[%c0_2, %c0_3] : memref<18x128xf32, #tpu.memory_space<vmem>>, vector<1x128xf32>
    tpu.vector_store %arg11[%c0_2, %c0_3], %2 {strides = array<i32>} : memref<18x128xf32, #tpu.memory_space<vmem>>, vector<1x128xf32>,
    %cst_4 = arith.constant 0.000000e+00 : f32
    %4 = vector.broadcast %cst_4 : f32 to vector<1x128xf32>
    %c17 = arith.constant 17 : index
    %c0_5 = arith.constant 0 : index
    %5 = vector.load %arg11[%c17, %c0_5] : memref<18x128xf32, #tpu.memory_space<vmem>>, vector<1x128xf32>
    tpu.vector_store %arg11[%c17, %c0_5], %4 {strides = array<i32>} : memref<18x128xf32, #tpu.memory_space<vmem>>, vector<1x128xf32>,
    %c1 = arith.constant 1 : index
    %c0_6 = arith.constant 0 : index
    %6 = vector.load %arg11[%c1, %c0_6] : memref<18x128xf32, #tpu.memory_space<vmem>>, vector<16x128xf32>
    tpu.vector_store %arg11[%c1, %c0_6], %1 {strides = array<i32>} : memref<18x128xf32, #tpu.memory_space<vmem>>, vector<16x128xf32>,
    %c0_7 = arith.constant 0 : index
    %c0_8 = arith.constant 0 : index
    %7 = vector.load %arg11[%c0_7, %c0_8] : memref<18x128xf32, #tpu.memory_space<vmem>>, vector<16x128xf32>
    %c0_9 = arith.constant 0 : index
    %c0_10 = arith.constant 0 : index
    %c0_11 = arith.constant 0 : index
    %8 = vector.load %arg2[%c0_9, %c0_10, %c0_11] : memref<3x128x64xf32, #tpu.memory_space<vmem>>, vector<1x128x64xf32>
    %9 = vector.shape_cast %8 : vector<1x128x64xf32> to vector<128x64xf32>
    %cst_12 = arith.constant dense<0.000000e+00> : vector<16x64xf32>
    %10 = tpu.matmul %7, %9, %cst_12 {dimension_numbers = #tpu.dot_dimension_numbers<[1], [0], [0], [1], [0, 0, 1, 1], [], []>} : vector<16x128xf32>, vector<128x64xf32>, vector<16x64xf32> -> vector<16x64xf32>
    %c1_13 = arith.constant 1 : index
    %c0_14 = arith.constant 0 : index
    %11 = vector.load %arg11[%c1_13, %c0_14] : memref<18x128xf32, #tpu.memory_space<vmem>>, vector<16x128xf32>
    %c1_15 = arith.constant 1 : index
    %c0_16 = arith.constant 0 : index
    %c0_17 = arith.constant 0 : index
    %12 = vector.load %arg2[%c1_15, %c0_16, %c0_17] : memref<3x128x64xf32, #tpu.memory_space<vmem>>, vector<1x128x64xf32>
    %13 = vector.shape_cast %12 : vector<1x128x64xf32> to vector<128x64xf32>
    %cst_18 = arith.constant dense<0.000000e+00> : vector<16x64xf32>
    %14 = tpu.matmul %11, %13, %cst_18 {dimension_numbers = #tpu.dot_dimension_numbers<[1], [0], [0], [1], [0, 0, 1, 1], [], []>} : vector<16x128xf32>, vector<128x64xf32>, vector<16x64xf32> -> vector<16x64xf32>
    %15 = arith.addf %10, %14 : vector<16x64xf32>
    %c2 = arith.constant 2 : index
    %c0_19 = arith.constant 0 : index
    %16 = vector.load %arg11[%c2, %c0_19] : memref<18x128xf32, #tpu.memory_space<vmem>>, vector<16x128xf32>
    %c2_20 = arith.constant 2 : index
    %c0_21 = arith.constant 0 : index
    %c0_22 = arith.constant 0 : index
    %17 = vector.load %arg2[%c2_20, %c0_21, %c0_22] : memref<3x128x64xf32, #tpu.memory_space<vmem>>, vector<1x128x64xf32>
    %18 = vector.shape_cast %17 : vector<1x128x64xf32> to vector<128x64xf32>
    %cst_23 = arith.constant dense<0.000000e+00> : vector<16x64xf32>
    %19 = tpu.matmul %16, %18, %cst_23 {dimension_numbers = #tpu.dot_dimension_numbers<[1], [0], [0], [1], [0, 0, 1, 1], [], []>} : vector<16x128xf32>, vector<128x64xf32>, vector<16x64xf32> -> vector<16x64xf32>
    %20 = arith.addf %15, %19 : vector<16x64xf32>
    %c0_24 = arith.constant 0 : index
    %c0_25 = arith.constant 0 : index
    %21 = vector.load %arg3[%c0_24, %c0_25] : memref<1x64xf32, #tpu.memory_space<vmem>>, vector<1x64xf32>
    %22 = vector.broadcast %21 : vector<1x64xf32> to vector<16x64xf32>
    %23 = arith.addf %20, %22 : vector<16x64xf32>
    %cst_26 = arith.constant 0.000000e+00 : f32
    %24 = vector.broadcast %cst_26 : f32 to vector<16x64xf32>
    %25 = arith.maximumf %23, %24 : vector<16x64xf32>
    %cst_27 = arith.constant 0.000000e+00 : f32
    %26 = vector.broadcast %cst_27 : f32 to vector<2x64xf32>
    %c0_28 = arith.constant 0 : index
    %c0_29 = arith.constant 0 : index
    %27 = vector.load %arg12[%c0_28, %c0_29] : memref<20x64xf32, #tpu.memory_space<vmem>>, vector<2x64xf32>
    tpu.vector_store %arg12[%c0_28, %c0_29], %26 {strides = array<i32>} : memref<20x64xf32, #tpu.memory_space<vmem>>, vector<2x64xf32>,
    %cst_30 = arith.constant 0.000000e+00 : f32
    %28 = vector.broadcast %cst_30 : f32 to vector<2x64xf32>
    %c18 = arith.constant 18 : index
    %c0_31 = arith.constant 0 : index
    %29 = vector.load %arg12[%c18, %c0_31] : memref<20x64xf32, #tpu.memory_space<vmem>>, vector<2x64xf32>
    tpu.vector_store %arg12[%c18, %c0_31], %28 {strides = array<i32>} : memref<20x64xf32, #tpu.memory_space<vmem>>, vector<2x64xf32>,
    %c2_32 = arith.constant 2 : index
    %c0_33 = arith.constant 0 : index
    %30 = vector.load %arg12[%c2_32, %c0_33] : memref<20x64xf32, #tpu.memory_space<vmem>>, vector<16x64xf32>
    tpu.vector_store %arg12[%c2_32, %c0_33], %25 {strides = array<i32>} : memref<20x64xf32, #tpu.memory_space<vmem>>, vector<16x64xf32>,
    %c0_34 = arith.constant 0 : index
    %c0_35 = arith.constant 0 : index
    %c0_36 = arith.constant 0 : index
    %31 = vector.load %arg4[%c0_34, %c0_35, %c0_36] : memref<2x3x64xf32, #tpu.memory_space<vmem>>, vector<2x3x64xf32>
    %c0_37 = arith.constant 0 : index
    %c0_38 = arith.constant 0 : index
    %32 = vector.load %arg5[%c0_37, %c0_38] : memref<2x64xf32, #tpu.memory_space<vmem>>, vector<2x64xf32>
    %c0_39 = arith.constant 0 : index
    %c0_40 = arith.constant 0 : index
    %33 = vector.load %arg7[%c0_39, %c0_40] : memref<2x64xf32, #tpu.memory_space<vmem>>, vector<2x64xf32>
    %c1_41 = arith.constant 1 : index
    %c0_42 = arith.constant 0 : index
    %34 = vector.load %arg12[%c1_41, %c0_42] : memref<20x64xf32, #tpu.memory_space<vmem>>, vector<16x64xf32>
    %35 = vector.extract_strided_slice %31 {offsets = [0, 0, 0], sizes = [1, 1, 64], strides = [1, 1, 1]} : vector<2x3x64xf32> to vector<1x1x64xf32>
    %36 = vector.shape_cast %35 : vector<1x1x64xf32> to vector<64xf32>
    %37 = vector.shape_cast %36 : vector<64xf32> to vector<1x64xf32>
    %38 = vector.broadcast %37 : vector<1x64xf32> to vector<16x64xf32>
    %39 = arith.mulf %34, %38 : vector<16x64xf32>
    %c2_43 = arith.constant 2 : index
    %c0_44 = arith.constant 0 : index
    %40 = vector.load %arg12[%c2_43, %c0_44] : memref<20x64xf32, #tpu.memory_space<vmem>>, vector<16x64xf32>
    %41 = vector.extract_strided_slice %31 {offsets = [0, 1, 0], sizes = [1, 1, 64], strides = [1, 1, 1]} : vector<2x3x64xf32> to vector<1x1x64xf32>
    %42 = vector.shape_cast %41 : vector<1x1x64xf32> to vector<64xf32>
    %43 = vector.shape_cast %42 : vector<64xf32> to vector<1x64xf32>
    %44 = vector.broadcast %43 : vector<1x64xf32> to vector<16x64xf32>
    %45 = arith.mulf %40, %44 : vector<16x64xf32>
    %46 = arith.addf %39, %45 : vector<16x64xf32>
    %c3 = arith.constant 3 : index
    %c0_45 = arith.constant 0 : index
    %47 = vector.load %arg12[%c3, %c0_45] : memref<20x64xf32, #tpu.memory_space<vmem>>, vector<16x64xf32>
    %48 = vector.extract_strided_slice %31 {offsets = [0, 2, 0], sizes = [1, 1, 64], strides = [1, 1, 1]} : vector<2x3x64xf32> to vector<1x1x64xf32>
    %49 = vector.shape_cast %48 : vector<1x1x64xf32> to vector<64xf32>
    %50 = vector.shape_cast %49 : vector<64xf32> to vector<1x64xf32>
    %51 = vector.broadcast %50 : vector<1x64xf32> to vector<16x64xf32>
    %52 = arith.mulf %47, %51 : vector<16x64xf32>
    %53 = arith.addf %46, %52 : vector<16x64xf32>
    %54 = vector.extract_strided_slice %32 {offsets = [0, 0], sizes = [1, 64], strides = [1, 1]} : vector<2x64xf32> to vector<1x64xf32>
    %55 = vector.shape_cast %54 : vector<1x64xf32> to vector<64xf32>
    %56 = vector.shape_cast %55 : vector<64xf32> to vector<1x64xf32>
    %57 = vector.broadcast %56 : vector<1x64xf32> to vector<16x64xf32>
    %58 = arith.addf %53, %57 : vector<16x64xf32>
    %cst_46 = arith.constant 0.000000e+00 : f32
    %59 = vector.broadcast %cst_46 : f32 to vector<16x64xf32>
    %60 = arith.maximumf %58, %59 : vector<16x64xf32>
    %c0_47 = arith.constant 0 : index
    %c0_48 = arith.constant 0 : index
    %c0_49 = arith.constant 0 : index
    %61 = vector.load %arg6[%c0_47, %c0_48, %c0_49] : memref<2x64x64xf32, #tpu.memory_space<vmem>>, vector<1x64x64xf32>
    %62 = vector.shape_cast %61 : vector<1x64x64xf32> to vector<64x64xf32>
    %cst_50 = arith.constant dense<0.000000e+00> : vector<16x64xf32>
    %63 = tpu.matmul %60, %62, %cst_50 {dimension_numbers = #tpu.dot_dimension_numbers<[1], [0], [0], [1], [0, 0, 1, 1], [], []>} : vector<16x64xf32>, vector<64x64xf32>, vector<16x64xf32> -> vector<16x64xf32>
    %64 = vector.extract_strided_slice %33 {offsets = [0, 0], sizes = [1, 64], strides = [1, 1]} : vector<2x64xf32> to vector<1x64xf32>
    %65 = vector.shape_cast %64 : vector<1x64xf32> to vector<64xf32>
    %66 = vector.shape_cast %65 : vector<64xf32> to vector<1x64xf32>
    %67 = vector.broadcast %66 : vector<1x64xf32> to vector<16x64xf32>
    %68 = arith.addf %63, %67 : vector<16x64xf32>
    %cst_51 = arith.constant 0.000000e+00 : f32
    %69 = vector.broadcast %cst_51 : f32 to vector<16x64xf32>
    %70 = arith.maximumf %68, %69 : vector<16x64xf32>
    %c0_52 = arith.constant 0 : index
    %c0_53 = arith.constant 0 : index
    %71 = vector.load %arg12[%c0_52, %c0_53] : memref<20x64xf32, #tpu.memory_space<vmem>>, vector<16x64xf32>
    %72 = vector.extract_strided_slice %31 {offsets = [1, 0, 0], sizes = [1, 1, 64], strides = [1, 1, 1]} : vector<2x3x64xf32> to vector<1x1x64xf32>
    %73 = vector.shape_cast %72 : vector<1x1x64xf32> to vector<64xf32>
    %74 = vector.shape_cast %73 : vector<64xf32> to vector<1x64xf32>
    %75 = vector.broadcast %74 : vector<1x64xf32> to vector<16x64xf32>
    %76 = arith.mulf %71, %75 : vector<16x64xf32>
    %c2_54 = arith.constant 2 : index
    %c0_55 = arith.constant 0 : index
    %77 = vector.load %arg12[%c2_54, %c0_55] : memref<20x64xf32, #tpu.memory_space<vmem>>, vector<16x64xf32>
    %78 = vector.extract_strided_slice %31 {offsets = [1, 1, 0], sizes = [1, 1, 64], strides = [1, 1, 1]} : vector<2x3x64xf32> to vector<1x1x64xf32>
    %79 = vector.shape_cast %78 : vector<1x1x64xf32> to vector<64xf32>
    %80 = vector.shape_cast %79 : vector<64xf32> to vector<1x64xf32>
    %81 = vector.broadcast %80 : vector<1x64xf32> to vector<16x64xf32>
    %82 = arith.mulf %77, %81 : vector<16x64xf32>
    %83 = arith.addf %76, %82 : vector<16x64xf32>
    %c4 = arith.constant 4 : index
    %c0_56 = arith.constant 0 : index
    %84 = vector.load %arg12[%c4, %c0_56] : memref<20x64xf32, #tpu.memory_space<vmem>>, vector<16x64xf32>
    %85 = vector.extract_strided_slice %31 {offsets = [1, 2, 0], sizes = [1, 1, 64], strides = [1, 1, 1]} : vector<2x3x64xf32> to vector<1x1x64xf32>
    %86 = vector.shape_cast %85 : vector<1x1x64xf32> to vector<64xf32>
    %87 = vector.shape_cast %86 : vector<64xf32> to vector<1x64xf32>
    %88 = vector.broadcast %87 : vector<1x64xf32> to vector<16x64xf32>
    %89 = arith.mulf %84, %88 : vector<16x64xf32>
    %90 = arith.addf %83, %89 : vector<16x64xf32>
    %91 = vector.extract_strided_slice %32 {offsets = [1, 0], sizes = [1, 64], strides = [1, 1]} : vector<2x64xf32> to vector<1x64xf32>
    %92 = vector.shape_cast %91 : vector<1x64xf32> to vector<64xf32>
    %93 = vector.shape_cast %92 : vector<64xf32> to vector<1x64xf32>
    %94 = vector.broadcast %93 : vector<1x64xf32> to vector<16x64xf32>
    %95 = arith.addf %90, %94 : vector<16x64xf32>
    %cst_57 = arith.constant 0.000000e+00 : f32
    %96 = vector.broadcast %cst_57 : f32 to vector<16x64xf32>
    %97 = arith.maximumf %95, %96 : vector<16x64xf32>
    %c1_58 = arith.constant 1 : index
    %c0_59 = arith.constant 0 : index
    %c0_60 = arith.constant 0 : index
    %98 = vector.load %arg6[%c1_58, %c0_59, %c0_60] : memref<2x64x64xf32, #tpu.memory_space<vmem>>, vector<1x64x64xf32>
    %99 = vector.shape_cast %98 : vector<1x64x64xf32> to vector<64x64xf32>
    %cst_61 = arith.constant dense<0.000000e+00> : vector<16x64xf32>
    %100 = tpu.matmul %97, %99, %cst_61 {dimension_numbers = #tpu.dot_dimension_numbers<[1], [0], [0], [1], [0, 0, 1, 1], [], []>} : vector<16x64xf32>, vector<64x64xf32>, vector<16x64xf32> -> vector<16x64xf32>
    %101 = vector.extract_strided_slice %33 {offsets = [1, 0], sizes = [1, 64], strides = [1, 1]} : vector<2x64xf32> to vector<1x64xf32>
    %102 = vector.shape_cast %101 : vector<1x64xf32> to vector<64xf32>
    %103 = vector.shape_cast %102 : vector<64xf32> to vector<1x64xf32>
    %104 = vector.broadcast %103 : vector<1x64xf32> to vector<16x64xf32>
    %105 = arith.addf %100, %104 : vector<16x64xf32>
    %cst_62 = arith.constant 0.000000e+00 : f32
    %106 = vector.broadcast %cst_62 : f32 to vector<16x64xf32>
    %107 = arith.maximumf %105, %106 : vector<16x64xf32>
    %108 = arith.addf %70, %107 : vector<16x64xf32>
    %c0_63 = arith.constant 0 : index
    %c0_64 = arith.constant 0 : index
    %109 = vector.load %arg8[%c0_63, %c0_64] : memref<64x128xf32, #tpu.memory_space<vmem>>, vector<64x128xf32>
    %cst_65 = arith.constant dense<0.000000e+00> : vector<16x128xf32>
    %110 = tpu.matmul %108, %109, %cst_65 {dimension_numbers = #tpu.dot_dimension_numbers<[1], [0], [0], [1], [0, 0, 1, 1], [], []>} : vector<16x64xf32>, vector<64x128xf32>, vector<16x128xf32> -> vector<16x128xf32>
    %c0_66 = arith.constant 0 : index
    %c0_67 = arith.constant 0 : index
    %111 = vector.load %arg9[%c0_66, %c0_67] : memref<1x128xf32, #tpu.memory_space<vmem>>, vector<1x128xf32>
    %112 = vector.broadcast %111 : vector<1x128xf32> to vector<16x128xf32>
    %113 = arith.addf %110, %112 : vector<16x128xf32>
    %cst_68 = arith.constant 0.000000e+00 : f32
    %114 = vector.broadcast %cst_68 : f32 to vector<16x128xf32>
    %115 = arith.maximumf %113, %114 : vector<16x128xf32>
    %116 = arith.addf %115, %1 : vector<16x128xf32>
    %c0_69 = arith.constant 0 : index
    %c0_70 = arith.constant 0 : index
    %c0_71 = arith.constant 0 : index
    %117 = vector.load %arg10[%c0_69, %c0_70, %c0_71] : memref<1x16x128xf32, #tpu.memory_space<vmem>>, vector<1x16x128xf32>
    %118 = vector.shape_cast %117 : vector<1x16x128xf32> to vector<16x128xf32>
    %119 = vector.shape_cast %116 : vector<16x128xf32> to vector<1x16x128xf32>
    tpu.vector_store %arg10[%c0_69, %c0_70, %c0_71], %119 {strides = array<i32>} : memref<1x16x128xf32, #tpu.memory_space<vmem>>, vector<1x16x128xf32>,
    return
  }
  func.func @transform_0(%arg0: i32) -> (i32, i32, i32) {
    %c0_i32 = arith.constant 0 : i32
    %c0_i32_0 = arith.constant 0 : i32
    %c0_i32_1 = arith.constant 0 : i32
    return %arg0, %c0_i32, %c0_i32_0 : i32, i32, i32
  }
  func.func @transform_1(%arg0: i32) -> (i32, i32, i32) {
    %c0_i32 = arith.constant 0 : i32
    %c0_i32_0 = arith.constant 0 : i32
    %c0_i32_1 = arith.constant 0 : i32
    %c0_i32_2 = arith.constant 0 : i32
    return %c0_i32, %c0_i32_0, %c0_i32_1 : i32, i32, i32
  }
  func.func @transform_2(%arg0: i32) -> (i32, i32) {
    %c0_i32 = arith.constant 0 : i32
    %c0_i32_0 = arith.constant 0 : i32
    %c0_i32_1 = arith.constant 0 : i32
    return %c0_i32, %c0_i32_0 : i32, i32
  }
  func.func @transform_3(%arg0: i32) -> (i32, i32, i32) {
    %c0_i32 = arith.constant 0 : i32
    %c0_i32_0 = arith.constant 0 : i32
    %c0_i32_1 = arith.constant 0 : i32
    %c0_i32_2 = arith.constant 0 : i32
    return %c0_i32, %c0_i32_0, %c0_i32_1 : i32, i32, i32
  }
  func.func @transform_4(%arg0: i32) -> (i32, i32) {
    %c0_i32 = arith.constant 0 : i32
    %c0_i32_0 = arith.constant 0 : i32
    %c0_i32_1 = arith.constant 0 : i32
    return %c0_i32, %c0_i32_0 : i32, i32
  }
  func.func @transform_5(%arg0: i32) -> (i32, i32, i32) {
    %c0_i32 = arith.constant 0 : i32
    %c0_i32_0 = arith.constant 0 : i32
    %c0_i32_1 = arith.constant 0 : i32
    %c0_i32_2 = arith.constant 0 : i32
    return %c0_i32, %c0_i32_0, %c0_i32_1 : i32, i32, i32
  }
  func.func @transform_6(%arg0: i32) -> (i32, i32) {
    %c0_i32 = arith.constant 0 : i32
    %c0_i32_0 = arith.constant 0 : i32
    %c0_i32_1 = arith.constant 0 : i32
    return %c0_i32, %c0_i32_0 : i32, i32
  }
  func.func @transform_7(%arg0: i32) -> (i32, i32) {
    %c0_i32 = arith.constant 0 : i32
    %c0_i32_0 = arith.constant 0 : i32
    %c0_i32_1 = arith.constant 0 : i32
    return %c0_i32, %c0_i32_0 : i32, i32
  }
  func.func @transform_8(%arg0: i32) -> (i32, i32) {
    %c0_i32 = arith.constant 0 : i32
    %c0_i32_0 = arith.constant 0 : i32
    %c0_i32_1 = arith.constant 0 : i32
    return %c0_i32, %c0_i32_0 : i32, i32
  }
  func.func @transform_9(%arg0: i32) -> (i32, i32, i32) {
    %c0_i32 = arith.constant 0 : i32
    %c0_i32_0 = arith.constant 0 : i32
    %c0_i32_1 = arith.constant 0 : i32
    return %arg0, %c0_i32, %c0_i32_0 : i32, i32, i32
  }
}

</mosaic_0001>

<llo_original>
// kernel: tile.40
$region0: #{tile.40}
  #allocation0 [shape = 's32[1]{0}', space=sflag, size = 0x4, scoped, tag = 'scoped memory for tile.40']
  %s0 = inlined_call_operand.vmem [shape: f32[4], index: 0, kind: input, shape index: {}]
  %s1 = inlined_call_operand.vmem [shape: f32[16,4], index: 1, kind: output, shape index: {}]
  // Predicated region
  $region2: #{tile.40} parent=0 // pred_check
    _
  $region3: #{tile.40} parent=0 // pred_check_branch
    %3 = sbr.rel (0) target = $region5
  $region4: #{tile.40} parent=0 // pred_region
    _
  $region5: #{tile.40} parent=0 // pred_fallthru
    _
  %v4 = vld [vmem:[%s0] ss:$0 sm:$0xff]
  %5 = vst [vmem:[%s1] sm:$0xff] %v4
  %s6 = scalar_lea.vmem %s1, 8
  %7 = vst [vmem:[%s6] sm:$0xff] %v4

// kernel: mul.87
$region0: #{mul.87}
  %s0 = inlined_call_operand.vmem [shape: f32[16,4], index: 0, kind: input, shape index: {}]
  %s1 = inlined_call_operand.vmem [shape: f32[64], index: 1, kind: output, shape index: {}]
  $region1: #{mul.87} parent=0
    #allocation0 [shape = 'u8[4096]{0}', space=vmem, size = 0x1000, scoped, tag = 'scoped mem for output reshape']
    %v2 = vld [vmem:[%s0] sm:$0x1]
    %vm3 = vcmask 31744
    %4 = vst.msk [vmem:[#allocation0] sm:$0x1] %vm3, %v2
    %s5 = scalar_lea.vmem %s0, 15
    %v6 = vld [vmem:[%s5] sm:$0x1]
    %7 = vrot.lane.b32.xlu0 %v6, 60
    %v8 = vpop.permute.xlu0 %7
    %vm9 = vcmask 523744
    %10 = vst.msk [vmem:[#allocation0] sm:$0x1] %vm9, %v8
    %s11 = scalar_lea.vmem %s0, 14
    %v12 = vld [vmem:[%s11] sm:$0x1]
    %13 = vrot.lane.b32.xlu0 %v12, 56
    %v14 = vpop.permute.xlu0 %13
    %vm15 = vcmask 490944
    %16 = vst.msk [vmem:[#allocation0] sm:$0x1] %vm15, %v14
    %s17 = scalar_lea.vmem %s0, 13
    %v18 = vld [vmem:[%s17] sm:$0x1]
    %19 = vrot.lane.b32.xlu0 %v18, 52
    %v20 = vpop.permute.xlu0 %19
    %vm21 = vcmask 458144
    %22 = vst.msk [vmem:[#allocation0] sm:$0x1] %vm21, %v20
    %s23 = scalar_lea.vmem %s0, 12
    %v24 = vld [vmem:[%s23] sm:$0x1]
    %25 = vrot.lane.b32.xlu0 %v24, 48
    %v26 = vpop.permute.xlu0 %25
    %vm27 = vcmask 425344
    %28 = vst.msk [vmem:[#allocation0] sm:$0x1] %vm27, %v26
    %s29 = scalar_lea.vmem %s0, 11
    %v30 = vld [vmem:[%s29] sm:$0x1]
    %31 = vrot.lane.b32.xlu0 %v30, 44
    %v32 = vpop.permute.xlu0 %31
    %vm33 = vcmask 392544
    %34 = vst.msk [vmem:[#allocation0] sm:$0x1] %vm33, %v32
    %s35 = scalar_lea.vmem %s0, 10
    %v36 = vld [vmem:[%s35] sm:$0x1]
    %37 = vrot.lane.b32.xlu0 %v36, 40
    %v38 = vpop.permute.xlu0 %37
    %vm39 = vcmask 359744
    %40 = vst.msk [vmem:[#allocation0] sm:$0x1] %vm39, %v38
    %s41 = scalar_lea.vmem %s0, 9
    %v42 = vld [vmem:[%s41] sm:$0x1]
    %43 = vrot.lane.b32.xlu0 %v42, 36
    %v44 = vpop.permute.xlu0 %43
    %vm45 = vcmask 326944
    %46 = vst.msk [vmem:[#allocation0] sm:$0x1] %vm45, %v44
    %s47 = scalar_lea.vmem %s0, 8
    %v48 = vld [vmem:[%s47] sm:$0x1]
    %49 = vrot.lane.b32.xlu0 %v48, 32
    %v50 = vpop.permute.xlu0 %49
    %vm51 = vcmask 294144
    %52 = vst.msk [vmem:[#allocation0] sm:$0x1] %vm51, %v50
    %s53 = scalar_lea.vmem %s0, 7
    %v54 = vld [vmem:[%s53] sm:$0x1]
    %55 = vrot.lane.b32.xlu0 %v54, 28
    %v56 = vpop.permute.xlu0 %55
    %vm57 = vcmask 261344
    %58 = vst.msk [vmem:[#allocation0] sm:$0x1] %vm57, %v56
    %s59 = scalar_lea.vmem %s0, 6
    %v60 = vld [vmem:[%s59] sm:$0x1]
    %61 = vrot.lane.b32.xlu0 %v60, 24
    %v62 = vpop.permute.xlu0 %61
    %vm63 = vcmask 228544
    %64 = vst.msk [vmem:[#allocation0] sm:$0x1] %vm63, %v62
    %s65 = scalar_lea.vmem %s0, 5
    %v66 = vld [vmem:[%s65] sm:$0x1]
    %67 = vrot.lane.b32.xlu0 %v66, 20
    %v68 = vpop.permute.xlu0 %67
    %vm69 = vcmask 195744
    %70 = vst.msk [vmem:[#allocation0] sm:$0x1] %vm69, %v68
    %s71 = scalar_lea.vmem %s0, 4
    %v72 = vld [vmem:[%s71] sm:$0x1]
    %73 = vrot.lane.b32.xlu0 %v72, 16
    %v74 = vpop.permute.xlu0 %73
    %vm75 = vcmask 162944
    %76 = vst.msk [vmem:[#allocation0] sm:$0x1] %vm75, %v74
    %s77 = scalar_lea.vmem %s0, 3
    %v78 = vld [vmem:[%s77] sm:$0x1]
    %79 = vrot.lane.b32.xlu0 %v78, 12
    %v80 = vpop.permute.xlu0 %79
    %vm81 = vcmask 130144
    %82 = vst.msk [vmem:[#allocation0] sm:$0x1] %vm81, %v80
    %s83 = scalar_lea.vmem %s0, 2
    %v84 = vld [vmem:[%s83] sm:$0x1]
    %85 = vrot.lane.b32.xlu0 %v84, 8
    %v86 = vpop.permute.xlu0 %85
    %vm87 = vcmask 97344
    %88 = vst.msk [vmem:[#allocation0] sm:$0x1] %vm87, %v86
    %s89 = scalar_lea.vmem %s0, 1
    %v90 = vld [vmem:[%s89] sm:$0x1]
    %91 = vrot.lane.b32.xlu0 %v90, 4
    %v92 = vpop.permute.xlu0 %91
    %vm93 = vcmask 64544
    %94 = vst.msk [vmem:[#allocation0] sm:$0x1] %vm93, %v92
    %s96 = sshllo.u32 0, 1
    %v98 = vld [vmem:[#allocation0] sm:%s96]
    %s99 = sshllo.u32 0, 1
    %100 = vst [vmem:[%s1] sm:%s99] %v98

// kernel: tile.45
$region0: #{tile.45}
  %s0 = inlined_call_operand.vmem [shape: f32[16,4], index: 0, kind: input, shape index: {}]
  %s1 = inlined_call_operand.vmem [shape: f32[1,64], index: 1, kind: output, shape index: {}]
  $region1: #{tile.45} parent=0
    #allocation0 [shape = 'u8[4096]{0}', space=vmem, size = 0x1000, scoped, tag = 'scoped mem for output reshape']
    %v2 = vld [vmem:[%s0] sm:$0x1]
    %vm3 = vcmask 31744
    %4 = vst.msk [vmem:[#allocation0] sm:$0x1] %vm3, %v2
    %s5 = scalar_lea.vmem %s0, 15
    %v6 = vld [vmem:[%s5] sm:$0x1]
    %7 = vrot.lane.b32.xlu0 %v6, 60
    %v8 = vpop.permute.xlu0 %7
    %vm9 = vcmask 523744
    %10 = vst.msk [vmem:[#allocation0] sm:$0x1] %vm9, %v8
    %s11 = scalar_lea.vmem %s0, 14
    %v12 = vld [vmem:[%s11] sm:$0x1]
    %13 = vrot.lane.b32.xlu0 %v12, 56
    %v14 = vpop.permute.xlu0 %13
    %vm15 = vcmask 490944
    %16 = vst.msk [vmem:[#allocation0] sm:$0x1] %vm15, %v14
    %s17 = scalar_lea.vmem %s0, 13
    %v18 = vld [vmem:[%s17] sm:$0x1]
    %19 = vrot.lane.b32.xlu0 %v18, 52
    %v20 = vpop.permute.xlu0 %19
    %vm21 = vcmask 458144
    %22 = vst.msk [vmem:[#allocation0] sm:$0x1] %vm21, %v20
    %s23 = scalar_lea.vmem %s0, 12
    %v24 = vld [vmem:[%s23] sm:$0x1]
    %25 = vrot.lane.b32.xlu0 %v24, 48
    %v26 = vpop.permute.xlu0 %25
    %vm27 = vcmask 425344
    %28 = vst.msk [vmem:[#allocation0] sm:$0x1] %vm27, %v26
    %s29 = scalar_lea.vmem %s0, 11
    %v30 = vld [vmem:[%s29] sm:$0x1]
    %31 = vrot.lane.b32.xlu0 %v30, 44
    %v32 = vpop.permute.xlu0 %31
    %vm33 = vcmask 392544
    %34 = vst.msk [vmem:[#allocation0] sm:$0x1] %vm33, %v32
    %s35 = scalar_lea.vmem %s0, 10
    %v36 = vld [vmem:[%s35] sm:$0x1]
    %37 = vrot.lane.b32.xlu0 %v36, 40
    %v38 = vpop.permute.xlu0 %37
    %vm39 = vcmask 359744
    %40 = vst.msk [vmem:[#allocation0] sm:$0x1] %vm39, %v38
    %s41 = scalar_lea.vmem %s0, 9
    %v42 = vld [vmem:[%s41] sm:$0x1]
    %43 = vrot.lane.b32.xlu0 %v42, 36
    %v44 = vpop.permute.xlu0 %43
    %vm45 = vcmask 326944
    %46 = vst.msk [vmem:[#allocation0] sm:$0x1] %vm45, %v44
    %s47 = scalar_lea.vmem %s0, 8
    %v48 = vld [vmem:[%s47] sm:$0x1]
    %49 = vrot.lane.b32.xlu0 %v48, 32
    %v50 = vpop.permute.xlu0 %49
    %vm51 = vcmask 294144
    %52 = vst.msk [vmem:[#allocation0] sm:$0x1] %vm51, %v50
    %s53 = scalar_lea.vmem %s0, 7
    %v54 = vld [vmem:[%s53] sm:$0x1]
    %55 = vrot.lane.b32.xlu0 %v54, 28
    %v56 = vpop.permute.xlu0 %55
    %vm57 = vcmask 261344
    %58 = vst.msk [vmem:[#allocation0] sm:$0x1] %vm57, %v56
    %s59 = scalar_lea.vmem %s0, 6
    %v60 = vld [vmem:[%s59] sm:$0x1]
    %61 = vrot.lane.b32.xlu0 %v60, 24
    %v62 = vpop.permute.xlu0 %61
    %vm63 = vcmask 228544
    %64 = vst.msk [vmem:[#allocation0] sm:$0x1] %vm63, %v62
    %s65 = scalar_lea.vmem %s0, 5
    %v66 = vld [vmem:[%s65] sm:$0x1]
    %67 = vrot.lane.b32.xlu0 %v66, 20
    %v68 = vpop.permute.xlu0 %67
    %vm69 = vcmask 195744
    %70 = vst.msk [vmem:[#allocation0] sm:$0x1] %vm69, %v68
    %s71 = scalar_lea.vmem %s0, 4
    %v72 = vld [vmem:[%s71] sm:$0x1]
    %73 = vrot.lane.b32.xlu0 %v72, 16
    %v74 = vpop.permute.xlu0 %73
    %vm75 = vcmask 162944
    %76 = vst.msk [vmem:[#allocation0] sm:$0x1] %vm75, %v74
    %s77 = scalar_lea.vmem %s0, 3
    %v78 = vld [vmem:[%s77] sm:$0x1]
    %79 = vrot.lane.b32.xlu0 %v78, 12
    %v80 = vpop.permute.xlu0 %79
    %vm81 = vcmask 130144
    %82 = vst.msk [vmem:[#allocation0] sm:$0x1] %vm81, %v80
    %s83 = scalar_lea.vmem %s0, 2
    %v84 = vld [vmem:[%s83] sm:$0x1]
    %85 = vrot.lane.b32.xlu0 %v84, 8
    %v86 = vpop.permute.xlu0 %85
    %vm87 = vcmask 97344
    %88 = vst.msk [vmem:[#allocation0] sm:$0x1] %vm87, %v86
    %s89 = scalar_lea.vmem %s0, 1
    %v90 = vld [vmem:[%s89] sm:$0x1]
    %91 = vrot.lane.b32.xlu0 %v90, 4
    %v92 = vpop.permute.xlu0 %91
    %vm93 = vcmask 64544
    %94 = vst.msk [vmem:[#allocation0] sm:$0x1] %vm93, %v92
    %s96 = sshllo.u32 0, 1
    %v98 = vld [vmem:[#allocation0] sm:%s96]
    %s99 = sshllo.u32 0, 1
    %100 = vst [vmem:[%s1] sm:%s99] %v98

// kernel: tile.74
$region0: #{tile.74}
  #allocation0 [shape = 's32[1]{0}', space=sflag, size = 0x4, scoped, tag = 'scoped memory for tile.74']
  %s0 = inlined_call_operand.vmem [shape: f32[8], index: 0, kind: input, shape index: {}]
  %s1 = inlined_call_operand.vmem [shape: f32[16,8], index: 1, kind: output, shape index: {}]
  // Predicated region
  $region2: #{tile.74} parent=0 // pred_check
    _
  $region3: #{tile.74} parent=0 // pred_check_branch
    %3 = sbr.rel (0) target = $region5
  $region4: #{tile.74} parent=0 // pred_region
    _
  $region5: #{tile.74} parent=0 // pred_fallthru
    _
  %v4 = vld [vmem:[%s0] ss:$0 sm:$0xff]
  %5 = vst [vmem:[%s1] sm:$0xff] %v4
  %s6 = scalar_lea.vmem %s1, 8
  %7 = vst [vmem:[%s6] sm:$0xff] %v4

// kernel: tile.75
$region0: #{tile.75}
  %s0 = inlined_call_operand.vmem [shape: f32[16,8], index: 0, kind: input, shape index: {}]
  %s1 = inlined_call_operand.vmem [shape: f32[1,128], index: 1, kind: output, shape index: {}]
  $region1: #{tile.75} parent=0
    #allocation0 [shape = 'u8[4096]{0}', space=vmem, size = 0x1000, scoped, tag = 'scoped mem for output reshape']
    %v2 = vld [vmem:[%s0] sm:$0x1]
    %vm3 = vcmask 64512
    %4 = vst.msk [vmem:[#allocation0] sm:$0x1] %vm3, %v2
    %s5 = scalar_lea.vmem %s0, 15
    %v6 = vld [vmem:[%s5] sm:$0x1]
    %7 = vrot.lane.b32.xlu0 %v6, 120
    %v8 = vpop.permute.xlu0 %7
    %vm9 = vcmask 1048512
    %10 = vst.msk [vmem:[#allocation0] sm:$0x1] %vm9, %v8
    %s11 = scalar_lea.vmem %s0, 14
    %v12 = vld [vmem:[%s11] sm:$0x1]
    %13 = vrot.lane.b32.xlu0 %v12, 112
    %v14 = vpop.permute.xlu0 %13
    %vm15 = vcmask 982912
    %16 = vst.msk [vmem:[#allocation0] sm:$0x1] %vm15, %v14
    %s17 = scalar_lea.vmem %s0, 13
    %v18 = vld [vmem:[%s17] sm:$0x1]
    %19 = vrot.lane.b32.xlu0 %v18, 104
    %v20 = vpop.permute.xlu0 %19
    %vm21 = vcmask 917312
    %22 = vst.msk [vmem:[#allocation0] sm:$0x1] %vm21, %v20
    %s23 = scalar_lea.vmem %s0, 12
    %v24 = vld [vmem:[%s23] sm:$0x1]
    %25 = vrot.lane.b32.xlu0 %v24, 96
    %v26 = vpop.permute.xlu0 %25
    %vm27 = vcmask 851712
    %28 = vst.msk [vmem:[#allocation0] sm:$0x1] %vm27, %v26
    %s29 = scalar_lea.vmem %s0, 11
    %v30 = vld [vmem:[%s29] sm:$0x1]
    %31 = vrot.lane.b32.xlu0 %v30, 88
    %v32 = vpop.permute.xlu0 %31
    %vm33 = vcmask 786112
    %34 = vst.msk [vmem:[#allocation0] sm:$0x1] %vm33, %v32
    %s35 = scalar_lea.vmem %s0, 10
    %v36 = vld [vmem:[%s35] sm:$0x1]
    %37 = vrot.lane.b32.xlu0 %v36, 80
    %v38 = vpop.permute.xlu0 %37
    %vm39 = vcmask 720512
    %40 = vst.msk [vmem:[#allocation0] sm:$0x1] %vm39, %v38
    %s41 = scalar_lea.vmem %s0, 9
    %v42 = vld [vmem:[%s41] sm:$0x1]
    %43 = vrot.lane.b32.xlu0 %v42, 72
    %v44 = vpop.permute.xlu0 %43
    %vm45 = vcmask 654912
    %46 = vst.msk [vmem:[#allocation0] sm:$0x1] %vm45, %v44
    %s47 = scalar_lea.vmem %s0, 8
    %v48 = vld [vmem:[%s47] sm:$0x1]
    %49 = vrot.lane.b32.xlu0 %v48, 64
    %v50 = vpop.permute.xlu0 %49
    %vm51 = vcmask 589312
    %52 = vst.msk [vmem:[#allocation0] sm:$0x1] %vm51, %v50
    %s53 = scalar_lea.vmem %s0, 7
    %v54 = vld [vmem:[%s53] sm:$0x1]
    %55 = vrot.lane.b32.xlu0 %v54, 56
    %v56 = vpop.permute.xlu0 %55
    %vm57 = vcmask 523712
    %58 = vst.msk [vmem:[#allocation0] sm:$0x1] %vm57, %v56
    %s59 = scalar_lea.vmem %s0, 6
    %v60 = vld [vmem:[%s59] sm:$0x1]
    %61 = vrot.lane.b32.xlu0 %v60, 48
    %v62 = vpop.permute.xlu0 %61
    %vm63 = vcmask 458112
    %64 = vst.msk [vmem:[#allocation0] sm:$0x1] %vm63, %v62
    %s65 = scalar_lea.vmem %s0, 5
    %v66 = vld [vmem:[%s65] sm:$0x1]
    %67 = vrot.lane.b32.xlu0 %v66, 40
    %v68 = vpop.permute.xlu0 %67
    %vm69 = vcmask 392512
    %70 = vst.msk [vmem:[#allocation0] sm:$0x1] %vm69, %v68
    %s71 = scalar_lea.vmem %s0, 4
    %v72 = vld [vmem:[%s71] sm:$0x1]
    %73 = vrot.lane.b32.xlu0 %v72, 32
    %v74 = vpop.permute.xlu0 %73
    %vm75 = vcmask 326912
    %76 = vst.msk [vmem:[#allocation0] sm:$0x1] %vm75, %v74
    %s77 = scalar_lea.vmem %s0, 3
    %v78 = vld [vmem:[%s77] sm:$0x1]
    %79 = vrot.lane.b32.xlu0 %v78, 24
    %v80 = vpop.permute.xlu0 %79
    %vm81 = vcmask 261312
    %82 = vst.msk [vmem:[#allocation0] sm:$0x1] %vm81, %v80
    %s83 = scalar_lea.vmem %s0, 2
    %v84 = vld [vmem:[%s83] sm:$0x1]
    %85 = vrot.lane.b32.xlu0 %v84, 16
    %v86 = vpop.permute.xlu0 %85
    %vm87 = vcmask 195712
    %88 = vst.msk [vmem:[#allocation0] sm:$0x1] %vm87, %v86
    %s89 = scalar_lea.vmem %s0, 1
    %v90 = vld [vmem:[%s89] sm:$0x1]
    %91 = vrot.lane.b32.xlu0 %v90, 8
    %v92 = vpop.permute.xlu0 %91
    %vm93 = vcmask 130112
    %94 = vst.msk [vmem:[#allocation0] sm:$0x1] %vm93, %v92
    %s96 = sshllo.u32 0, 1
    %v98 = vld [vmem:[#allocation0] sm:%s96]
    %s99 = sshllo.u32 0, 1
    %100 = vst [vmem:[%s1] sm:%s99] %v98

// kernel: dab_module_forward.1
$region0: #{dab_module_forward.1}
  #allocation0 [shape = 'u32[]', space=smem, size = 0x4, offset = 0x4, fixed_abs, tag = 'smem constant byte address 0x4 - core index']
  #allocation1 [shape = 'u32[144,128]{1,0:T(1,128)}', space=vmem, size = 0x12000, scoped, tag = 'internal scratch']
  #allocation2 [shape = 'f32[18,128]{1,0:T(8,128)}', space=vmem, size = 0x3000, scoped, tag = 'scratch operand']
  #allocation3 [shape = 'f32[20,64]{1,0:T(8,128)}', space=vmem, size = 0x3000, scoped, tag = 'scratch operand']
  %s0 = inlined_call_operand.vmem [shape: f32[2,16,128], index: 0, kind: input, shape index: {}, may-alias: {0,9}]
  %s1 = inlined_call_operand.vmem [shape: f32[3,128,64], index: 1, kind: input, shape index: {}]
  %s2 = inlined_call_operand.vmem [shape: f32[1,64], index: 2, kind: input, shape index: {}]
  %s3 = inlined_call_operand.vmem [shape: f32[2,3,64], index: 3, kind: input, shape index: {}]
  %s4 = inlined_call_operand.vmem [shape: f32[2,64], index: 4, kind: input, shape index: {}]
  %s5 = inlined_call_operand.vmem [shape: f32[2,64,64], index: 5, kind: input, shape index: {}]
  %s6 = inlined_call_operand.vmem [shape: f32[2,64], index: 6, kind: input, shape index: {}]
  %s7 = inlined_call_operand.vmem [shape: f32[64,128], index: 7, kind: input, shape index: {}]
  %s8 = inlined_call_operand.vmem [shape: f32[1,128], index: 8, kind: input, shape index: {}]
  %s9 = inlined_call_operand.vmem [shape: f32[2,16,128], index: 9, kind: output, shape index: {}, may-alias: {0,9}]
  %s10 = sld [smem:[#allocation0]]
  $region69: #{dab_module_forward.1} parent=0
    _
  %s12 = ssub.s32 1, %s10
  %s13 = scalar_select 0, %s12, %s10
  loop: start=0, step=1, limit=4
  $region2: #{dab_module_forward.1} parent=0 // loop_pre_header
    _
  $region3: #{dab_module_forward.1} parent=0 // loop_header
    %s15 = sphi 0, %s19
    %p16 = scmp.ge.s32.totalorder %s15, 4
    %s25 = sphi 0, %s27
    %s28 = sphi 0, %s25
    %s29 = sphi 0, %s28
    %s45 = sphi 0, %s29
    %s49 = sphi 0, %s49
    %s51 = sphi 0, %s49
    %s52 = sphi 0, %s51
    %s66 = sphi 0, %s52
    %s70 = sphi 0, %s70
    %s72 = sphi 0, %s70
    %s73 = sphi 0, %s72
    %s87 = sphi 0, %s73
    %s91 = sphi 0, %s91
    %s93 = sphi 0, %s91
    %s94 = sphi 0, %s93
    %s108 = sphi 0, %s94
    %s112 = sphi 0, %s112
    %s114 = sphi 0, %s112
    %s115 = sphi 0, %s114
    %s129 = sphi 0, %s115
    %s133 = sphi 0, %s133
    %s135 = sphi 0, %s133
    %s136 = sphi 0, %s135
    %s150 = sphi 0, %s136
    %s154 = sphi 0, %s154
    %s156 = sphi 0, %s154
    %s157 = sphi 0, %s156
    %s171 = sphi 0, %s157
    %s175 = sphi 0, %s175
    %s177 = sphi 0, %s175
    %s178 = sphi 0, %s177
    %s192 = sphi 0, %s178
    %s196 = sphi 0, %s196
    %s198 = sphi 0, %s196
    %s199 = sphi 0, %s198
    %s213 = sphi 0, %s199
    %s219 = sphi 0, %s221
    %s222 = sphi 0, %s219
    %s223 = sphi 0, %s222
    %s239 = sphi 0, %s223
  $region4: #{dab_module_forward.1} parent=0 // loop_header_branch
    %18 = sbr.rel (%p16) target = $region8
  $region5: #{dab_module_forward.1} parent=0 // loop_body
    %s20 = ssub.s32 %s15, 1
    %s21 = ssub.s32 %s15, 2
    %s22 = sadd.s32 %s15, 1
    %s23 = ssub.s32 %s15, %s22
    %p24 = scmp.eq.s32.totalorder %s23, 0
    %s26 = sadd.s32 %s25, 1
    %s27 = scalar_select %p24, %s25, %s26
    %p30 = pneg %p24
    %p31 = scmp.eq.s32.totalorder %s15, 1
    %p32 = por %p30, %p31
    %p33 = scmp.ne.s32.totalorder %s25, %s28
    %p34 = scmp.eq.s32.totalorder %s15, 0
    %p35 = por %p33, %p34
    %p36 = scmp.ne.s32.totalorder %s25, %s28
    %p37 = scmp.eq.s32.totalorder %s20, 1
    %p38 = por %p36, %p37
    %p39 = scmp.ne.s32.totalorder %s28, %s29
    %p40 = scmp.eq.s32.totalorder %s20, 0
    %p41 = por %p39, %p40
    %p42 = scmp.ne.s32.totalorder %s28, %s29
    %p43 = scmp.eq.s32.totalorder %s21, 1
    %p44 = por %p42, %p43
    %p46 = scmp.ne.s32.totalorder %s29, %s45
    %p47 = scmp.eq.s32.totalorder %s21, 0
    %p48 = por %p46, %p47
    %s50 = sadd.s32 %s49, 1
    %p53 = scmp.eq.s32.totalorder %s15, 1
    %p54 = scmp.ne.s32.totalorder %s49, %s51
    %p55 = scmp.eq.s32.totalorder %s15, 0
    %p56 = por %p54, %p55
    %p57 = scmp.ne.s32.totalorder %s49, %s51
    %p58 = scmp.eq.s32.totalorder %s20, 1
    %p59 = por %p57, %p58
    %p60 = scmp.ne.s32.totalorder %s51, %s52
    %p61 = scmp.eq.s32.totalorder %s20, 0
    %p62 = por %p60, %p61
    %p63 = scmp.ne.s32.totalorder %s51, %s52
    %p64 = scmp.eq.s32.totalorder %s21, 1
    %p65 = por %p63, %p64
    %p67 = scmp.ne.s32.totalorder %s52, %s66
    %p68 = scmp.eq.s32.totalorder %s21, 0
    %p69 = por %p67, %p68
    %s71 = sadd.s32 %s70, 1
    %p74 = scmp.eq.s32.totalorder %s15, 1
    %p75 = scmp.ne.s32.totalorder %s70, %s72
    %p76 = scmp.eq.s32.totalorder %s15, 0
    %p77 = por %p75, %p76
    %p78 = scmp.ne.s32.totalorder %s70, %s72
    %p79 = scmp.eq.s32.totalorder %s20, 1
    %p80 = por %p78, %p79
    %p81 = scmp.ne.s32.totalorder %s72, %s73
    %p82 = scmp.eq.s32.totalorder %s20, 0
    %p83 = por %p81, %p82
    %p84 = scmp.ne.s32.totalorder %s72, %s73
    %p85 = scmp.eq.s32.totalorder %s21, 1
    %p86 = por %p84, %p85
    %p88 = scmp.ne.s32.totalorder %s73, %s87
    %p89 = scmp.eq.s32.totalorder %s21, 0
    %p90 = por %p88, %p89
    %s92 = sadd.s32 %s91, 1
    %p95 = scmp.eq.s32.totalorder %s15, 1
    %p96 = scmp.ne.s32.totalorder %s91, %s93
    %p97 = scmp.eq.s32.totalorder %s15, 0
    %p98 = por %p96, %p97
    %p99 = scmp.ne.s32.totalorder %s91, %s93
    %p100 = scmp.eq.s32.totalorder %s20, 1
    %p101 = por %p99, %p100
    %p102 = scmp.ne.s32.totalorder %s93, %s94
    %p103 = scmp.eq.s32.totalorder %s20, 0
    %p104 = por %p102, %p103
    %p105 = scmp.ne.s32.totalorder %s93, %s94
    %p106 = scmp.eq.s32.totalorder %s21, 1
    %p107 = por %p105, %p106
    %p109 = scmp.ne.s32.totalorder %s94, %s108
    %p110 = scmp.eq.s32.totalorder %s21, 0
    %p111 = por %p109, %p110
    %s113 = sadd.s32 %s112, 1
    %p116 = scmp.eq.s32.totalorder %s15, 1
    %p117 = scmp.ne.s32.totalorder %s112, %s114
    %p118 = scmp.eq.s32.totalorder %s15, 0
    %p119 = por %p117, %p118
    %p120 = scmp.ne.s32.totalorder %s112, %s114
    %p121 = scmp.eq.s32.totalorder %s20, 1
    %p122 = por %p120, %p121
    %p123 = scmp.ne.s32.totalorder %s114, %s115
    %p124 = scmp.eq.s32.totalorder %s20, 0
    %p125 = por %p123, %p124
    %p126 = scmp.ne.s32.totalorder %s114, %s115
    %p127 = scmp.eq.s32.totalorder %s21, 1
    %p128 = por %p126, %p127
    %p130 = scmp.ne.s32.totalorder %s115, %s129
    %p131 = scmp.eq.s32.totalorder %s21, 0
    %p132 = por %p130, %p131
    %s134 = sadd.s32 %s133, 1
    %p137 = scmp.eq.s32.totalorder %s15, 1
    %p138 = scmp.ne.s32.totalorder %s133, %s135
    %p139 = scmp.eq.s32.totalorder %s15, 0
    %p140 = por %p138, %p139
    %p141 = scmp.ne.s32.totalorder %s133, %s135
    %p142 = scmp.eq.s32.totalorder %s20, 1
    %p143 = por %p141, %p142
    %p144 = scmp.ne.s32.totalorder %s135, %s136
    %p145 = scmp.eq.s32.totalorder %s20, 0
    %p146 = por %p144, %p145
    %p147 = scmp.ne.s32.totalorder %s135, %s136
    %p148 = scmp.eq.s32.totalorder %s21, 1
    %p149 = por %p147, %p148
    %p151 = scmp.ne.s32.totalorder %s136, %s150
    %p152 = scmp.eq.s32.totalorder %s21, 0
    %p153 = por %p151, %p152
    %s155 = sadd.s32 %s154, 1
    %p158 = scmp.eq.s32.totalorder %s15, 1
    %p159 = scmp.ne.s32.totalorder %s154, %s156
    %p160 = scmp.eq.s32.totalorder %s15, 0
    %p161 = por %p159, %p160
    %p162 = scmp.ne.s32.totalorder %s154, %s156
    %p163 = scmp.eq.s32.totalorder %s20, 1
    %p164 = por %p162, %p163
    %p165 = scmp.ne.s32.totalorder %s156, %s157
    %p166 = scmp.eq.s32.totalorder %s20, 0
    %p167 = por %p165, %p166
    %p168 = scmp.ne.s32.totalorder %s156, %s157
    %p169 = scmp.eq.s32.totalorder %s21, 1
    %p170 = por %p168, %p169
    %p172 = scmp.ne.s32.totalorder %s157, %s171
    %p173 = scmp.eq.s32.totalorder %s21, 0
    %p174 = por %p172, %p173
    %s176 = sadd.s32 %s175, 1
    %p179 = scmp.eq.s32.totalorder %s15, 1
    %p180 = scmp.ne.s32.totalorder %s175, %s177
    %p181 = scmp.eq.s32.totalorder %s15, 0
    %p182 = por %p180, %p181
    %p183 = scmp.ne.s32.totalorder %s175, %s177
    %p184 = scmp.eq.s32.totalorder %s20, 1
    %p185 = por %p183, %p184
    %p186 = scmp.ne.s32.totalorder %s177, %s178
    %p187 = scmp.eq.s32.totalorder %s20, 0
    %p188 = por %p186, %p187
    %p189 = scmp.ne.s32.totalorder %s177, %s178
    %p190 = scmp.eq.s32.totalorder %s21, 1
    %p191 = por %p189, %p190
    %p193 = scmp.ne.s32.totalorder %s178, %s192
    %p194 = scmp.eq.s32.totalorder %s21, 0
    %p195 = por %p193, %p194
    %s197 = sadd.s32 %s196, 1
    %p200 = scmp.eq.s32.totalorder %s15, 1
    %p201 = scmp.ne.s32.totalorder %s196, %s198
    %p202 = scmp.eq.s32.totalorder %s15, 0
    %p203 = por %p201, %p202
    %p204 = scmp.ne.s32.totalorder %s196, %s198
    %p205 = scmp.eq.s32.totalorder %s20, 1
    %p206 = por %p204, %p205
    %p207 = scmp.ne.s32.totalorder %s198, %s199
    %p208 = scmp.eq.s32.totalorder %s20, 0
    %p209 = por %p207, %p208
    %p210 = scmp.ne.s32.totalorder %s198, %s199
    %p211 = scmp.eq.s32.totalorder %s21, 1
    %p212 = por %p210, %p211
    %p214 = scmp.ne.s32.totalorder %s199, %s213
    %p215 = scmp.eq.s32.totalorder %s21, 0
    %p216 = por %p214, %p215
    %s217 = ssub.s32 %s15, %s22
    %p218 = scmp.eq.s32.totalorder %s217, 0
    %s220 = sadd.s32 %s219, 1
    %s221 = scalar_select %p218, %s219, %s220
    %p224 = pneg %p218
    %p225 = scmp.eq.s32.totalorder %s15, 1
    %p226 = por %p224, %p225
    %p227 = scmp.ne.s32.totalorder %s219, %s222
    %p228 = scmp.eq.s32.totalorder %s15, 0
    %p229 = por %p227, %p228
    %p230 = scmp.ne.s32.totalorder %s219, %s222
    %p231 = scmp.eq.s32.totalorder %s20, 1
    %p232 = por %p230, %p231
    %p233 = scmp.ne.s32.totalorder %s222, %s223
    %p234 = scmp.eq.s32.totalorder %s20, 0
    %p235 = por %p233, %p234
    %p236 = scmp.ne.s32.totalorder %s222, %s223
    %p237 = scmp.eq.s32.totalorder %s21, 1
    %p238 = por %p236, %p237
    %p240 = scmp.ne.s32.totalorder %s223, %s239
    %p241 = scmp.eq.s32.totalorder %s21, 0
    %p242 = por %p240, %p241
    %p243 = scmp.le.s32.totalorder 1, %s15
    %p244 = scmp.lt.s32.totalorder %s15, 3
    %p245 = pnand %p243, %p244
    %p246 = pneg %p245
    // Predicated region
    $region9: #{dab_module_forward.1} parent=5 // pred_check
      _
    $region10: #{dab_module_forward.1} parent=5 // pred_check_branch
      %248 = sbr.rel (%p245) target = $region12
    $region11: #{dab_module_forward.1} parent=5 // pred_region
      %s249 = ssub.s32 %s15, 1
      // Predicated region
      $region13: #{dab_module_forward.1} parent=11 // pred_check
        %p250 = pneg %p62
      $region14: #{dab_module_forward.1} parent=11 // pred_check_branch
        %252 = sbr.rel (%p250) target = $region16
      $region15: #{dab_module_forward.1} parent=11 // pred_region
        _
      $region16: #{dab_module_forward.1} parent=11 // pred_fallthru
        _
      // Predicated region
      $region17: #{dab_module_forward.1} parent=11 // pred_check
        %p253 = pneg %p83
      $region18: #{dab_module_forward.1} parent=11 // pred_check_branch
        %255 = sbr.rel (%p253) target = $region20
      $region19: #{dab_module_forward.1} parent=11 // pred_region
        _
      $region20: #{dab_module_forward.1} parent=11 // pred_fallthru
        _
      // Predicated region
      $region21: #{dab_module_forward.1} parent=11 // pred_check
        %p256 = pneg %p104
      $region22: #{dab_module_forward.1} parent=11 // pred_check_branch
        %258 = sbr.rel (%p256) target = $region24
      $region23: #{dab_module_forward.1} parent=11 // pred_region
        _
      $region24: #{dab_module_forward.1} parent=11 // pred_fallthru
        _
      // Predicated region
      $region25: #{dab_module_forward.1} parent=11 // pred_check
        %p259 = pneg %p125
      $region26: #{dab_module_forward.1} parent=11 // pred_check_branch
        %261 = sbr.rel (%p259) target = $region28
      $region27: #{dab_module_forward.1} parent=11 // pred_region
        _
      $region28: #{dab_module_forward.1} parent=11 // pred_fallthru
        _
      // Predicated region
      $region29: #{dab_module_forward.1} parent=11 // pred_check
        %p262 = pneg %p146
      $region30: #{dab_module_forward.1} parent=11 // pred_check_branch
        %264 = sbr.rel (%p262) target = $region32
      $region31: #{dab_module_forward.1} parent=11 // pred_region
        _
      $region32: #{dab_module_forward.1} parent=11 // pred_fallthru
        _
      // Predicated region
      $region33: #{dab_module_forward.1} parent=11 // pred_check
        %p265 = pneg %p167
      $region34: #{dab_module_forward.1} parent=11 // pred_check_branch
        %267 = sbr.rel (%p265) target = $region36
      $region35: #{dab_module_forward.1} parent=11 // pred_region
        _
      $region36: #{dab_module_forward.1} parent=11 // pred_fallthru
        _
      // Predicated region
      $region37: #{dab_module_forward.1} parent=11 // pred_check
        %p268 = pneg %p188
      $region38: #{dab_module_forward.1} parent=11 // pred_check_branch
        %270 = sbr.rel (%p268) target = $region40
      $region39: #{dab_module_forward.1} parent=11 // pred_region
        _
      $region40: #{dab_module_forward.1} parent=11 // pred_fallthru
        _
      // Predicated region
      $region41: #{dab_module_forward.1} parent=11 // pred_check
        %p271 = pneg %p209
      $region42: #{dab_module_forward.1} parent=11 // pred_check_branch
        %273 = sbr.rel (%p271) target = $region44
      $region43: #{dab_module_forward.1} parent=11 // pred_region
        _
      $region44: #{dab_module_forward.1} parent=11 // pred_fallthru
        _
    $region12: #{dab_module_forward.1} parent=5 // pred_fallthru
      _
    %p274 = scmp.lt.s32.totalorder %s15, 2
    // Predicated region
    $region45: #{dab_module_forward.1} parent=5 // pred_check
      %p275 = pneg %p274
    $region46: #{dab_module_forward.1} parent=5 // pred_check_branch
      %277 = sbr.rel (%p275) target = $region48
    $region47: #{dab_module_forward.1} parent=5 // pred_region
      // Predicated region
      $region49: #{dab_module_forward.1} parent=47 // pred_check
        %p278 = pneg %p35
      $region50: #{dab_module_forward.1} parent=47 // pred_check_branch
        %280 = sbr.rel (%p278) target = $region52
      $region51: #{dab_module_forward.1} parent=47 // pred_region
        %p281 = scmp.lt.s32.totalorder %s15, 1
        %s282 = scalar_select %p281, %s15, 1
        %s283 = smul.addr %s282, 2
        %s284 = smul.addr %s283, 8
        %s285 = scalar_lea.vmem %s0, %s284
      $region52: #{dab_module_forward.1} parent=47 // pred_fallthru
        _
    $region48: #{dab_module_forward.1} parent=5 // pred_fallthru
      _
    %p286 = scmp.le.s32.totalorder 1, %s15
    %p287 = scmp.lt.s32.totalorder %s15, 3
    %p288 = pnand %p286, %p287
    %p289 = pneg %p288
    // Predicated region
    $region53: #{dab_module_forward.1} parent=5 // pred_check
      _
    $region54: #{dab_module_forward.1} parent=5 // pred_check_branch
      %291 = sbr.rel (%p288) target = $region56
    $region55: #{dab_module_forward.1} parent=5 // pred_region
      %s292 = ssub.s32 %s15, 1
      %p293 = scmp.lt.s32.totalorder %s20, 1
      %s294 = scalar_select %p293, %s20, 1
      %s295 = smul.addr %s294, 2
      %s296 = smul.addr %s295, 8
      %s297 = scalar_lea.vmem %s0, %s296
      %p298 = pneg %p41
      %p299 = pneg %p38
      %p300 = pneg %p62
      %p301 = pneg %p59
      %p302 = pneg %p83
      %p303 = pneg %p80
      %p304 = pneg %p104
      %p305 = pneg %p101
      %p306 = pneg %p125
      %p307 = pneg %p122
      %p308 = pneg %p146
      %p309 = pneg %p143
      %p310 = pneg %p167
      %p311 = pneg %p164
      %p312 = pneg %p188
      %p313 = pneg %p185
      %p314 = pneg %p209
      %p315 = pneg %p206
      %p316 = pneg %p235
      %p317 = pneg %p232
      %p318 = scmp.lt.s32.totalorder %s20, 1
      %s319 = scalar_select %p318, %s20, 1
      %s320 = smul.addr %s319, 2
      %s321 = smul.addr %s320, 8
      %s322 = scalar_lea.vmem %s9, %s321
      %p323 = scmp.lt.s32.totalorder %s20, 1
      %s324 = scalar_select %p323, %s20, 1
      %s325 = smul.addr %s324, 2
      %s326 = smul.addr %s325, 8
      %s327 = scalar_lea.vmem %s0, %s326
      %p328 = scmp.lt.s32.totalorder %s20, 1
      %s329 = scalar_select %p328, %s20, 1
      %s330 = smul.addr %s329, 2
      %s331 = smul.addr %s330, 8
      %s332 = scalar_lea.vmem %s9, %s331
      %v333 = vld [vmem:[%s327] sm:$0xff]
      %v334 = vld [vmem:[%s327 + $0x8] sm:$0xff]
      %335 = vst [vmem:[#allocation2] sm:$0x1] 0.0
      %336 = vst [vmem:[#allocation2 + $0x11] sm:$0x1] 0.0
      %337 = vst [vmem:[#allocation2 + $0x1] sm:$0xff] %v333
      %338 = vst [vmem:[#allocation2 + $0x9] sm:$0xff] %v334
      %v339 = vld [vmem:[#allocation2] sm:$0xff]
      %v340 = vld [vmem:[#allocation2 + $0x8] sm:$0xff]
      %v341 = vld [vmem:[%s1] sm:$0xff]
      %v342 = vld [vmem:[%s1 + $0x8] sm:$0xff]
      %v343 = vld [vmem:[%s1 + $0x10] sm:$0xff]
      %v344 = vld [vmem:[%s1 + $0x18] sm:$0xff]
      %v345 = vld [vmem:[%s1 + $0x20] sm:$0xff]
      %v346 = vld [vmem:[%s1 + $0x28] sm:$0xff]
      %v347 = vld [vmem:[%s1 + $0x30] sm:$0xff]
      %v348 = vld [vmem:[%s1 + $0x38] sm:$0xff]
      %v349 = vld [vmem:[%s1 + $0x40] sm:$0xff]
      %v350 = vld [vmem:[%s1 + $0x48] sm:$0xff]
      %v351 = vld [vmem:[%s1 + $0x50] sm:$0xff]
      %v352 = vld [vmem:[%s1 + $0x58] sm:$0xff]
      %v353 = vld [vmem:[%s1 + $0x60] sm:$0xff]
      %v354 = vld [vmem:[%s1 + $0x68] sm:$0xff]
      %v355 = vld [vmem:[%s1 + $0x70] sm:$0xff]
      %v356 = vld [vmem:[%s1 + $0x78] sm:$0xff]
      %v357 = vld [vmem:[#allocation2 + $0x1] sm:$0xff]
      %v358 = vld [vmem:[#allocation2 + $0x9] sm:$0xff]
      %s359 = scalar_lea.vmem %s1, 128
      %v360 = vld [vmem:[%s359] sm:$0xff]
      %v361 = vld [vmem:[%s359 + $0x8] sm:$0xff]
      %v362 = vld [vmem:[%s359 + $0x10] sm:$0xff]
      %v363 = vld [vmem:[%s359 + $0x18] sm:$0xff]
      %v364 = vld [vmem:[%s359 + $0x20] sm:$0xff]
      %v365 = vld [vmem:[%s359 + $0x28] sm:$0xff]
      %v366 = vld [vmem:[%s359 + $0x30] sm:$0xff]
      %v367 = vld [vmem:[%s359 + $0x38] sm:$0xff]
      %v368 = vld [vmem:[%s359 + $0x40] sm:$0xff]
      %v369 = vld [vmem:[%s359 + $0x48] sm:$0xff]
      %v370 = vld [vmem:[%s359 + $0x50] sm:$0xff]
      %v371 = vld [vmem:[%s359 + $0x58] sm:$0xff]
      %v372 = vld [vmem:[%s359 + $0x60] sm:$0xff]
      %v373 = vld [vmem:[%s359 + $0x68] sm:$0xff]
      %v374 = vld [vmem:[%s359 + $0x70] sm:$0xff]
      %v375 = vld [vmem:[%s359 + $0x78] sm:$0xff]
      %376 = vmatprep.subr.mxu0 0.0
      %377 = vmatpush1.msra.mxu0 %v360
      %378 = vmatprep.subr.mxu0 0.0
      %379 = vmatpush1.msra.mxu0 %v361
      %380 = vmatprep.subr.mxu0 0.0
      %381 = vmatpush1.msra.mxu0 %v362
      %382 = vmatprep.subr.mxu0 0.0
      %383 = vmatpush1.msra.mxu0 %v363
      %384 = vmatprep.subr.mxu0 0.0
      %385 = vmatpush1.msra.mxu0 %v364
      %386 = vmatprep.subr.mxu0 0.0
      %387 = vmatpush1.msra.mxu0 %v365
      %388 = vmatprep.subr.mxu0 0.0
      %389 = vmatpush1.msra.mxu0 %v366
      %390 = vmatprep.subr.mxu0 0.0
      %391 = vmatpush1.msra.mxu0 %v367
      %392 = vmatprep.subr.mxu0 0.0
      %393 = vmatpush1.msra.mxu0 %v368
      %394 = vmatprep.subr.mxu0 0.0
      %395 = vmatpush1.msra.mxu0 %v369
      %396 = vmatprep.subr.mxu0 0.0
      %397 = vmatpush1.msra.mxu0 %v370
      %398 = vmatprep.subr.mxu0 0.0
      %399 = vmatpush1.msra.mxu0 %v371
      %400 = vmatprep.subr.mxu0 0.0
      %401 = vmatpush1.msra.mxu0 %v372
      %402 = vmatprep.subr.mxu0 0.0
      %403 = vmatpush1.msra.mxu0 %v373
      %404 = vmatprep.subr.mxu0 0.0
      %405 = vmatpush1.msra.mxu0 %v374
      %406 = vmatprep.subr.mxu0 0.0
      %407 = vmatpush1.msra.mxu0 %v375
      %408 = vmatprep.subr.mxu0 0.0
      %409 = vmatpush1.msra.mxu0 0.0
      %410 = vmatprep.subr.mxu0 0.0
      %411 = vmatpush1.msra.mxu0 0.0
      %412 = vmatprep.subr.mxu0 0.0
      %413 = vmatpush1.msra.mxu0 0.0
      %414 = vmatprep.subr.mxu0 0.0
      %415 = vmatpush1.msra.mxu0 0.0
      %416 = vmatprep.subr.mxu0 0.0
      %417 = vmatpush1.msra.mxu0 0.0
      %418 = vmatprep.subr.mxu0 0.0
      %419 = vmatpush1.msra.mxu0 0.0
      %420 = vmatprep.subr.mxu0 0.0
      %421 = vmatpush1.msra.mxu0 0.0
      %422 = vmatprep.subr.mxu0 0.0
      %423 = vmatpush1.msra.mxu0 0.0
      %424 = vmatprep.subr.mxu0 0.0
      %425 = vmatpush1.msra.mxu0 0.0
      %426 = vmatprep.subr.mxu0 0.0
      %427 = vmatpush1.msra.mxu0 0.0
      %428 = vmatprep.subr.mxu0 0.0
      %429 = vmatpush1.msra.mxu0 0.0
      %430 = vmatprep.subr.mxu0 0.0
      %431 = vmatpush1.msra.mxu0 0.0
      %432 = vmatprep.subr.mxu0 0.0
      %433 = vmatpush1.msra.mxu0 0.0
      %434 = vmatprep.subr.mxu0 0.0
      %435 = vmatpush1.msra.mxu0 0.0
      %436 = vmatprep.subr.mxu0 0.0
      %437 = vmatpush1.msra.mxu0 0.0
      %438 = vmatprep.subr.mxu0 0.0
      %439 = vmatpush1.msra.mxu0 0.0
      %440 = vmatprep.mubr.f32.mxu0 0.0
      %441 = vmatmul.mubr.f32.gmra.mrb[0].mxu0 %v357
      %v442 = vpop.f32.mrb[0].mxu0
      %v443 = vadd.f32 0.0, %v442
      %v444 = vpop.f32.mrb[0].mxu0
      %445 = vmatprep.mubr.f32.mxu0 0.0
      %446 = vmatmul.mubr.f32.gmra.mrb[0].mxu0 %v358
      %v447 = vpop.f32.mrb[0].mxu0
      %v448 = vadd.f32 0.0, %v447
      %v449 = vpop.f32.mrb[0].mxu0
      %450 = vdwg.mxu0
      %451 = vmatprep.subr.mxu0 0.0
      %452 = vmatpush1.msra.mxu0 %v341
      %453 = vmatprep.subr.mxu0 0.0
      %454 = vmatpush1.msra.mxu0 %v342
      %455 = vmatprep.subr.mxu0 0.0
      %456 = vmatpush1.msra.mxu0 %v343
      %457 = vmatprep.subr.mxu0 0.0
      %458 = vmatpush1.msra.mxu0 %v344
      %459 = vmatprep.subr.mxu0 0.0
      %460 = vmatpush1.msra.mxu0 %v345
      %461 = vmatprep.subr.mxu0 0.0
      %462 = vmatpush1.msra.mxu0 %v346
      %463 = vmatprep.subr.mxu0 0.0
      %464 = vmatpush1.msra.mxu0 %v347
      %465 = vmatprep.subr.mxu0 0.0
      %466 = vmatpush1.msra.mxu0 %v348
      %467 = vmatprep.subr.mxu0 0.0
      %468 = vmatpush1.msra.mxu0 %v349
      %469 = vmatprep.subr.mxu0 0.0
      %470 = vmatpush1.msra.mxu0 %v350
      %471 = vmatprep.subr.mxu0 0.0
      %472 = vmatpush1.msra.mxu0 %v351
      %473 = vmatprep.subr.mxu0 0.0
      %474 = vmatpush1.msra.mxu0 %v352
      %475 = vmatprep.subr.mxu0 0.0
      %476 = vmatpush1.msra.mxu0 %v353
      %477 = vmatprep.subr.mxu0 0.0
      %478 = vmatpush1.msra.mxu0 %v354
      %479 = vmatprep.subr.mxu0 0.0
      %480 = vmatpush1.msra.mxu0 %v355
      %481 = vmatprep.subr.mxu0 0.0
      %482 = vmatpush1.msra.mxu0 %v356
      %483 = vmatprep.subr.mxu0 0.0
      %484 = vmatpush1.msra.mxu0 0.0
      %485 = vmatprep.subr.mxu0 0.0
      %486 = vmatpush1.msra.mxu0 0.0
      %487 = vmatprep.subr.mxu0 0.0
      %488 = vmatpush1.msra.mxu0 0.0
      %489 = vmatprep.subr.mxu0 0.0
      %490 = vmatpush1.msra.mxu0 0.0
      %491 = vmatprep.subr.mxu0 0.0
      %492 = vmatpush1.msra.mxu0 0.0
      %493 = vmatprep.subr.mxu0 0.0
      %494 = vmatpush1.msra.mxu0 0.0
      %495 = vmatprep.subr.mxu0 0.0
      %496 = vmatpush1.msra.mxu0 0.0
      %497 = vmatprep.subr.mxu0 0.0
      %498 = vmatpush1.msra.mxu0 0.0
      %499 = vmatprep.subr.mxu0 0.0
      %500 = vmatpush1.msra.mxu0 0.0
      %501 = vmatprep.subr.mxu0 0.0
      %502 = vmatpush1.msra.mxu0 0.0
      %503 = vmatprep.subr.mxu0 0.0
      %504 = vmatpush1.msra.mxu0 0.0
      %505 = vmatprep.subr.mxu0 0.0
      %506 = vmatpush1.msra.mxu0 0.0
      %507 = vmatprep.subr.mxu0 0.0
      %508 = vmatpush1.msra.mxu0 0.0
      %509 = vmatprep.subr.mxu0 0.0
      %510 = vmatpush1.msra.mxu0 0.0
      %511 = vmatprep.subr.mxu0 0.0
      %512 = vmatpush1.msra.mxu0 0.0
      %513 = vmatprep.subr.mxu0 0.0
      %514 = vmatpush1.msra.mxu0 0.0
      %515 = vmatprep.mubr.f32.mxu0 0.0
      %516 = vmatmul.mubr.f32.gmra.mrb[0].mxu0 %v339
      %v517 = vpop.f32.mrb[0].mxu0
      %v518 = vadd.f32 %v443, %v517
      %v519 = vpop.f32.mrb[0].mxu0
      %520 = vmatprep.mubr.f32.mxu0 0.0
      %521 = vmatmul.mubr.f32.gmra.mrb[0].mxu0 %v340
      %v522 = vpop.f32.mrb[0].mxu0
      %v523 = vadd.f32 %v448, %v522
      %v524 = vpop.f32.mrb[0].mxu0
      %525 = vdwg.mxu0
      %v526 = vld [vmem:[#allocation2 + $0x2] sm:$0xff]
      %v527 = vld [vmem:[#allocation2 + $0xa] sm:$0xff]
      %s528 = scalar_lea.vmem %s1, 256
      %v529 = vld [vmem:[%s528] sm:$0xff]
      %v530 = vld [vmem:[%s528 + $0x8] sm:$0xff]
      %v531 = vld [vmem:[%s528 + $0x10] sm:$0xff]
      %v532 = vld [vmem:[%s528 + $0x18] sm:$0xff]
      %v533 = vld [vmem:[%s528 + $0x20] sm:$0xff]
      %v534 = vld [vmem:[%s528 + $0x28] sm:$0xff]
      %v535 = vld [vmem:[%s528 + $0x30] sm:$0xff]
      %v536 = vld [vmem:[%s528 + $0x38] sm:$0xff]
      %v537 = vld [vmem:[%s528 + $0x40] sm:$0xff]
      %v538 = vld [vmem:[%s528 + $0x48] sm:$0xff]
      %v539 = vld [vmem:[%s528 + $0x50] sm:$0xff]
      %v540 = vld [vmem:[%s528 + $0x58] sm:$0xff]
      %v541 = vld [vmem:[%s528 + $0x60] sm:$0xff]
      %v542 = vld [vmem:[%s528 + $0x68] sm:$0xff]
      %v543 = vld [vmem:[%s528 + $0x70] sm:$0xff]
      %v544 = vld [vmem:[%s528 + $0x78] sm:$0xff]
      %545 = vmatprep.subr.mxu0 0.0
      %546 = vmatpush1.msra.mxu0 %v529
      %547 = vmatprep.subr.mxu0 0.0
      %548 = vmatpush1.msra.mxu0 %v530
      %549 = vmatprep.subr.mxu0 0.0
      %550 = vmatpush1.msra.mxu0 %v531
      %551 = vmatprep.subr.mxu0 0.0
      %552 = vmatpush1.msra.mxu0 %v532
      %553 = vmatprep.subr.mxu0 0.0
      %554 = vmatpush1.msra.mxu0 %v533
      %555 = vmatprep.subr.mxu0 0.0
      %556 = vmatpush1.msra.mxu0 %v534
      %557 = vmatprep.subr.mxu0 0.0
      %558 = vmatpush1.msra.mxu0 %v535
      %559 = vmatprep.subr.mxu0 0.0
      %560 = vmatpush1.msra.mxu0 %v536
      %561 = vmatprep.subr.mxu0 0.0
      %562 = vmatpush1.msra.mxu0 %v537
      %563 = vmatprep.subr.mxu0 0.0
      %564 = vmatpush1.msra.mxu0 %v538
      %565 = vmatprep.subr.mxu0 0.0
      %566 = vmatpush1.msra.mxu0 %v539
      %567 = vmatprep.subr.mxu0 0.0
      %568 = vmatpush1.msra.mxu0 %v540
      %569 = vmatprep.subr.mxu0 0.0
      %570 = vmatpush1.msra.mxu0 %v541
      %571 = vmatprep.subr.mxu0 0.0
      %572 = vmatpush1.msra.mxu0 %v542
      %573 = vmatprep.subr.mxu0 0.0
      %574 = vmatpush1.msra.mxu0 %v543
      %575 = vmatprep.subr.mxu0 0.0
      %576 = vmatpush1.msra.mxu0 %v544
      %577 = vmatprep.subr.mxu0 0.0
      %578 = vmatpush1.msra.mxu0 0.0
      %579 = vmatprep.subr.mxu0 0.0
      %580 = vmatpush1.msra.mxu0 0.0
      %581 = vmatprep.subr.mxu0 0.0
      %582 = vmatpush1.msra.mxu0 0.0
      %583 = vmatprep.subr.mxu0 0.0
      %584 = vmatpush1.msra.mxu0 0.0
      %585 = vmatprep.subr.mxu0 0.0
      %586 = vmatpush1.msra.mxu0 0.0
      %587 = vmatprep.subr.mxu0 0.0
      %588 = vmatpush1.msra.mxu0 0.0
      %589 = vmatprep.subr.mxu0 0.0
      %590 = vmatpush1.msra.mxu0 0.0
      %591 = vmatprep.subr.mxu0 0.0
      %592 = vmatpush1.msra.mxu0 0.0
      %593 = vmatprep.subr.mxu0 0.0
      %594 = vmatpush1.msra.mxu0 0.0
      %595 = vmatprep.subr.mxu0 0.0
      %596 = vmatpush1.msra.mxu0 0.0
      %597 = vmatprep.subr.mxu0 0.0
      %598 = vmatpush1.msra.mxu0 0.0
      %599 = vmatprep.subr.mxu0 0.0
      %600 = vmatpush1.msra.mxu0 0.0
      %601 = vmatprep.subr.mxu0 0.0
      %602 = vmatpush1.msra.mxu0 0.0
      %603 = vmatprep.subr.mxu0 0.0
      %604 = vmatpush1.msra.mxu0 0.0
      %605 = vmatprep.subr.mxu0 0.0
      %606 = vmatpush1.msra.mxu0 0.0
      %607 = vmatprep.subr.mxu0 0.0
      %608 = vmatpush1.msra.mxu0 0.0
      %609 = vmatprep.mubr.f32.mxu0 0.0
      %610 = vmatmul.mubr.f32.gmra.mrb[0].mxu0 %v526
      %v611 = vpop.f32.mrb[0].mxu0
      %v612 = vadd.f32 0.0, %v611
      %v613 = vpop.f32.mrb[0].mxu0
      %614 = vmatprep.mubr.f32.mxu0 0.0
      %615 = vmatmul.mubr.f32.gmra.mrb[0].mxu0 %v527
      %v616 = vpop.f32.mrb[0].mxu0
      %v617 = vadd.f32 0.0, %v616
      %v618 = vpop.f32.mrb[0].mxu0
      %619 = vdwg.mxu0
      %v620 = vadd.f32 %v518, %v612
      %v621 = vadd.f32 %v523, %v617
      %v622 = vld [vmem:[%s2] sm:$0x1]
      %v624 = vlaneseq
      %v625 = vshrl.u32 %v624, 7
      %v626 = vsub.s32 0, %v625
      %v627 = vrot.slane %v622, %v626
      %v629 = vadd.f32 %v620, %v627
      %v630 = vadd.f32 %v621, %v627
      %v631 = vmax.f32 %v629, 0.0
      %v632 = vmax.f32 %v630, 0.0
      %vm633 = vcmask 517120
      %634 = vst.msk [vmem:[#allocation3] sm:$0x3] %vm633, 0.0
      %635 = vst.msk [vmem:[#allocation3 + $0x12] sm:$0x3] %vm633, 0.0
      %vm636 = vcmask 523264
      %637 = vst.msk [vmem:[#allocation3 + $0x2] sm:$0xff] %vm636, %v631
      %638 = vst.msk [vmem:[#allocation3 + $0xa] sm:$0xff] %vm636, %v632
      %v639 = vld [vmem:[%s3] sm:$0x7]
      %v640 = vld [vmem:[%s3 + $0x4] sm:$0x7]
      %v641 = vld [vmem:[%s4] sm:$0x3]
      %v642 = vld [vmem:[%s6] sm:$0x3]
      %v643 = vld [vmem:[#allocation3 + $0x1] sm:$0xff]
      %v644 = vld [vmem:[#allocation3 + $0x9] sm:$0xff]
      %v645 = vlaneseq
      %v646 = vshrl.u32 %v645, 7
      %v647 = vsub.s32 0, %v646
      %v648 = vrot.slane %v639, %v647
      %v649 = vmul.f32 %v643, %v648
      %v650 = vmul.f32 %v644, %v648
      %v651 = vld [vmem:[#allocation3 + $0x2] sm:$0xff]
      %v652 = vld [vmem:[#allocation3 + $0xa] sm:$0xff]
      %v653 = vlaneseq
      %v654 = vshrl.u32 %v653, 7
      %v655 = vsub.s32 1, %v654
      %v656 = vrot.slane %v639, %v655
      %v657 = vmul.f32 %v651, %v656
      %v658 = vmul.f32 %v652, %v656
      %v659 = vadd.f32 %v649, %v657
      %v660 = vadd.f32 %v650, %v658
      %v661 = vld [vmem:[#allocation3 + $0x3] sm:$0xff]
      %v662 = vld [vmem:[#allocation3 + $0xb] sm:$0xff]
      %v663 = vlaneseq
      %v664 = vshrl.u32 %v663, 7
      %v665 = vsub.s32 2, %v664
      %v666 = vrot.slane %v639, %v665
      %v667 = vmul.f32 %v661, %v666
      %v668 = vmul.f32 %v662, %v666
      %v669 = vadd.f32 %v659, %v667
      %v670 = vadd.f32 %v660, %v668
      %v671 = vlaneseq
      %v672 = vshrl.u32 %v671, 7
      %v673 = vsub.s32 0, %v672
      %v674 = vrot.slane %v641, %v673
      %v675 = vadd.f32 %v669, %v674
      %v676 = vadd.f32 %v670, %v674
      %v677 = vmax.f32 %v675, 0.0
      %v678 = vmax.f32 %v676, 0.0
      %v679 = vld [vmem:[%s5] sm:$0xff]
      %v680 = vld [vmem:[%s5 + $0x8] sm:$0xff]
      %v681 = vld [vmem:[%s5 + $0x10] sm:$0xff]
      %v682 = vld [vmem:[%s5 + $0x18] sm:$0xff]
      %v683 = vld [vmem:[%s5 + $0x20] sm:$0xff]
      %v684 = vld [vmem:[%s5 + $0x28] sm:$0xff]
      %v685 = vld [vmem:[%s5 + $0x30] sm:$0xff]
      %v686 = vld [vmem:[%s5 + $0x38] sm:$0xff]
      %v687 = vlaneseq
      %v688 = vshrl.u32 %v687, 7
      %v689 = vsub.s32 0, %v688
      %v690 = vrot.slane %v642, %v689
      %v692 = vsel %vm636, %v677, 0
      %v695 = vsel %vm636, %v678, 0
      %697 = vmatprep.subr.mxu0 0.0
      %698 = vmatpush1.msra.mxu0 %v679
      %699 = vmatprep.subr.mxu0 0.0
      %700 = vmatpush1.msra.mxu0 %v680
      %701 = vmatprep.subr.mxu0 0.0
      %702 = vmatpush1.msra.mxu0 %v681
      %703 = vmatprep.subr.mxu0 0.0
      %704 = vmatpush1.msra.mxu0 %v682
      %705 = vmatprep.subr.mxu0 0.0
      %706 = vmatpush1.msra.mxu0 %v683
      %707 = vmatprep.subr.mxu0 0.0
      %708 = vmatpush1.msra.mxu0 %v684
      %709 = vmatprep.subr.mxu0 0.0
      %710 = vmatpush1.msra.mxu0 %v685
      %711 = vmatprep.subr.mxu0 0.0
      %712 = vmatpush1.msra.mxu0 %v686
      %713 = vmatprep.subr.mxu0 0.0
      %714 = vmatpush1.msra.mxu0 0.0
      %715 = vmatprep.subr.mxu0 0.0
      %716 = vmatpush1.msra.mxu0 0.0
      %717 = vmatprep.subr.mxu0 0.0
      %718 = vmatpush1.msra.mxu0 0.0
      %719 = vmatprep.subr.mxu0 0.0
      %720 = vmatpush1.msra.mxu0 0.0
      %721 = vmatprep.subr.mxu0 0.0
      %722 = vmatpush1.msra.mxu0 0.0
      %723 = vmatprep.subr.mxu0 0.0
      %724 = vmatpush1.msra.mxu0 0.0
      %725 = vmatprep.subr.mxu0 0.0
      %726 = vmatpush1.msra.mxu0 0.0
      %727 = vmatprep.subr.mxu0 0.0
      %728 = vmatpush1.msra.mxu0 0.0
      %729 = vmatprep.subr.mxu0 0.0
      %730 = vmatpush1.msra.mxu0 0.0
      %731 = vmatprep.subr.mxu0 0.0
      %732 = vmatpush1.msra.mxu0 0.0
      %733 = vmatprep.subr.mxu0 0.0
      %734 = vmatpush1.msra.mxu0 0.0
      %735 = vmatprep.subr.mxu0 0.0
      %736 = vmatpush1.msra.mxu0 0.0
      %737 = vmatprep.subr.mxu0 0.0
      %738 = vmatpush1.msra.mxu0 0.0
      %739 = vmatprep.subr.mxu0 0.0
      %740 = vmatpush1.msra.mxu0 0.0
      %741 = vmatprep.subr.mxu0 0.0
      %742 = vmatpush1.msra.mxu0 0.0
      %743 = vmatprep.subr.mxu0 0.0
      %744 = vmatpush1.msra.mxu0 0.0
      %745 = vmatprep.subr.mxu0 0.0
      %746 = vmatpush1.msra.mxu0 0.0
      %747 = vmatprep.subr.mxu0 0.0
      %748 = vmatpush1.msra.mxu0 0.0
      %749 = vmatprep.subr.mxu0 0.0
      %750 = vmatpush1.msra.mxu0 0.0
      %751 = vmatprep.subr.mxu0 0.0
      %752 = vmatpush1.msra.mxu0 0.0
      %753 = vmatprep.subr.mxu0 0.0
      %754 = vmatpush1.msra.mxu0 0.0
      %755 = vmatprep.subr.mxu0 0.0
      %756 = vmatpush1.msra.mxu0 0.0
      %757 = vmatprep.subr.mxu0 0.0
      %758 = vmatpush1.msra.mxu0 0.0
      %759 = vmatprep.subr.mxu0 0.0
      %760 = vmatpush1.msra.mxu0 0.0
      %761 = vmatprep.mubr.f32.mxu0 0.0
      %762 = vmatmul.mubr.f32.gmra.mrb[0].mxu0 %v692
      %v763 = vpop.f32.mrb[0].mxu0
      %v764 = vadd.f32 %v690, %v763
      %v765 = vpop.f32.mrb[0].mxu0
      %766 = vmatprep.mubr.f32.mxu0 0.0
      %767 = vmatmul.mubr.f32.gmra.mrb[0].mxu0 %v695
      %v768 = vpop.f32.mrb[0].mxu0
      %v769 = vadd.f32 %v690, %v768
      %v770 = vpop.f32.mrb[0].mxu0
      %771 = vdwg.mxu0
      %v772 = vmax.f32 %v764, 0.0
      %v773 = vmax.f32 %v769, 0.0
      %v774 = vld [vmem:[#allocation3] sm:$0xff]
      %v775 = vld [vmem:[#allocation3 + $0x8] sm:$0xff]
      %v776 = vlaneseq
      %v777 = vshrl.u32 %v776, 7
      %v778 = vsub.s32 0, %v777
      %v779 = vrot.slane %v640, %v778
      %v780 = vmul.f32 %v774, %v779
      %v781 = vmul.f32 %v775, %v779
      %v782 = vlaneseq
      %v783 = vshrl.u32 %v782, 7
      %v784 = vsub.s32 1, %v783
      %v785 = vrot.slane %v640, %v784
      %v786 = vmul.f32 %v651, %v785
      %v787 = vmul.f32 %v652, %v785
      %v788 = vadd.f32 %v780, %v786
      %v789 = vadd.f32 %v781, %v787
      %v790 = vld [vmem:[#allocation3 + $0x4] sm:$0xff]
      %v791 = vld [vmem:[#allocation3 + $0xc] sm:$0xff]
      %v792 = vlaneseq
      %v793 = vshrl.u32 %v792, 7
      %v794 = vsub.s32 2, %v793
      %v795 = vrot.slane %v640, %v794
      %v796 = vmul.f32 %v790, %v795
      %v797 = vmul.f32 %v791, %v795
      %v798 = vadd.f32 %v788, %v796
      %v799 = vadd.f32 %v789, %v797
      %v800 = vlaneseq
      %v801 = vshrl.u32 %v800, 7
      %v802 = vsub.s32 1, %v801
      %v803 = vrot.slane %v641, %v802
      %v804 = vadd.f32 %v798, %v803
      %v805 = vadd.f32 %v799, %v803
      %v806 = vmax.f32 %v804, 0.0
      %v807 = vmax.f32 %v805, 0.0
      %s808 = scalar_lea.vmem %s5, 64
      %v809 = vld [vmem:[%s808] sm:$0xff]
      %v810 = vld [vmem:[%s808 + $0x8] sm:$0xff]
      %v811 = vld [vmem:[%s808 + $0x10] sm:$0xff]
      %v812 = vld [vmem:[%s808 + $0x18] sm:$0xff]
      %v813 = vld [vmem:[%s808 + $0x20] sm:$0xff]
      %v814 = vld [vmem:[%s808 + $0x28] sm:$0xff]
      %v815 = vld [vmem:[%s808 + $0x30] sm:$0xff]
      %v816 = vld [vmem:[%s808 + $0x38] sm:$0xff]
      %v817 = vlaneseq
      %v818 = vshrl.u32 %v817, 7
      %v819 = vsub.s32 1, %v818
      %v820 = vrot.slane %v642, %v819
      %v822 = vsel %vm636, %v806, 0
      %v825 = vsel %vm636, %v807, 0
      %827 = vmatprep.subr.mxu0 0.0
      %828 = vmatpush1.msra.mxu0 %v809
      %829 = vmatprep.subr.mxu0 0.0
      %830 = vmatpush1.msra.mxu0 %v810
      %831 = vmatprep.subr.mxu0 0.0
      %832 = vmatpush1.msra.mxu0 %v811
      %833 = vmatprep.subr.mxu0 0.0
      %834 = vmatpush1.msra.mxu0 %v812
      %835 = vmatprep.subr.mxu0 0.0
      %836 = vmatpush1.msra.mxu0 %v813
      %837 = vmatprep.subr.mxu0 0.0
      %838 = vmatpush1.msra.mxu0 %v814
      %839 = vmatprep.subr.mxu0 0.0
      %840 = vmatpush1.msra.mxu0 %v815
      %841 = vmatprep.subr.mxu0 0.0
      %842 = vmatpush1.msra.mxu0 %v816
      %843 = vmatprep.subr.mxu0 0.0
      %844 = vmatpush1.msra.mxu0 0.0
      %845 = vmatprep.subr.mxu0 0.0
      %846 = vmatpush1.msra.mxu0 0.0
      %847 = vmatprep.subr.mxu0 0.0
      %848 = vmatpush1.msra.mxu0 0.0
      %849 = vmatprep.subr.mxu0 0.0
      %850 = vmatpush1.msra.mxu0 0.0
      %851 = vmatprep.subr.mxu0 0.0
      %852 = vmatpush1.msra.mxu0 0.0
      %853 = vmatprep.subr.mxu0 0.0
      %854 = vmatpush1.msra.mxu0 0.0
      %855 = vmatprep.subr.mxu0 0.0
      %856 = vmatpush1.msra.mxu0 0.0
      %857 = vmatprep.subr.mxu0 0.0
      %858 = vmatpush1.msra.mxu0 0.0
      %859 = vmatprep.subr.mxu0 0.0
      %860 = vmatpush1.msra.mxu0 0.0
      %861 = vmatprep.subr.mxu0 0.0
      %862 = vmatpush1.msra.mxu0 0.0
      %863 = vmatprep.subr.mxu0 0.0
      %864 = vmatpush1.msra.mxu0 0.0
      %865 = vmatprep.subr.mxu0 0.0
      %866 = vmatpush1.msra.mxu0 0.0
      %867 = vmatprep.subr.mxu0 0.0
      %868 = vmatpush1.msra.mxu0 0.0
      %869 = vmatprep.subr.mxu0 0.0
      %870 = vmatpush1.msra.mxu0 0.0
      %871 = vmatprep.subr.mxu0 0.0
      %872 = vmatpush1.msra.mxu0 0.0
      %873 = vmatprep.subr.mxu0 0.0
      %874 = vmatpush1.msra.mxu0 0.0
      %875 = vmatprep.subr.mxu0 0.0
      %876 = vmatpush1.msra.mxu0 0.0
      %877 = vmatprep.subr.mxu0 0.0
      %878 = vmatpush1.msra.mxu0 0.0
      %879 = vmatprep.subr.mxu0 0.0
      %880 = vmatpush1.msra.mxu0 0.0
      %881 = vmatprep.subr.mxu0 0.0
      %882 = vmatpush1.msra.mxu0 0.0
      %883 = vmatprep.subr.mxu0 0.0
      %884 = vmatpush1.msra.mxu0 0.0
      %885 = vmatprep.subr.mxu0 0.0
      %886 = vmatpush1.msra.mxu0 0.0
      %887 = vmatprep.subr.mxu0 0.0
      %888 = vmatpush1.msra.mxu0 0.0
      %889 = vmatprep.subr.mxu0 0.0
      %890 = vmatpush1.msra.mxu0 0.0
      %891 = vmatprep.mubr.f32.mxu0 0.0
      %892 = vmatmul.mubr.f32.gmra.mrb[0].mxu0 %v822
      %v893 = vpop.f32.mrb[0].mxu0
      %v894 = vadd.f32 %v820, %v893
      %v895 = vpop.f32.mrb[0].mxu0
      %896 = vmatprep.mubr.f32.mxu0 0.0
      %897 = vmatmul.mubr.f32.gmra.mrb[0].mxu0 %v825
      %v898 = vpop.f32.mrb[0].mxu0
      %v899 = vadd.f32 %v820, %v898
      %v900 = vpop.f32.mrb[0].mxu0
      %901 = vdwg.mxu0
      %v902 = vmax.f32 %v894, 0.0
      %v903 = vmax.f32 %v899, 0.0
      %v904 = vadd.f32 %v772, %v902
      %v905 = vadd.f32 %v773, %v903
      %v906 = vld [vmem:[%s7] sm:$0xff]
      %v907 = vld [vmem:[%s7 + $0x8] sm:$0xff]
      %v908 = vld [vmem:[%s7 + $0x10] sm:$0xff]
      %v909 = vld [vmem:[%s7 + $0x18] sm:$0xff]
      %v910 = vld [vmem:[%s7 + $0x20] sm:$0xff]
      %v911 = vld [vmem:[%s7 + $0x28] sm:$0xff]
      %v912 = vld [vmem:[%s7 + $0x30] sm:$0xff]
      %v913 = vld [vmem:[%s7 + $0x38] sm:$0xff]
      %v914 = vld [vmem:[%s8] sm:$0x1]
      %v916 = vlaneseq
      %v917 = vshrl.u32 %v916, 7
      %v918 = vsub.s32 0, %v917
      %v919 = vrot.slane %v914, %v918
      %v922 = vsel %vm636, %v904, 0
      %v925 = vsel %vm636, %v905, 0
      %927 = vmatprep.subr.mxu0 0.0
      %928 = vmatpush1.msra.mxu0 %v906
      %929 = vmatprep.subr.mxu0 0.0
      %930 = vmatpush1.msra.mxu0 %v907
      %931 = vmatprep.subr.mxu0 0.0
      %932 = vmatpush1.msra.mxu0 %v908
      %933 = vmatprep.subr.mxu0 0.0
      %934 = vmatpush1.msra.mxu0 %v909
      %935 = vmatprep.subr.mxu0 0.0
      %936 = vmatpush1.msra.mxu0 %v910
      %937 = vmatprep.subr.mxu0 0.0
      %938 = vmatpush1.msra.mxu0 %v911
      %939 = vmatprep.subr.mxu0 0.0
      %940 = vmatpush1.msra.mxu0 %v912
      %941 = vmatprep.subr.mxu0 0.0
      %942 = vmatpush1.msra.mxu0 %v913
      %943 = vmatprep.subr.mxu0 0.0
      %944 = vmatpush1.msra.mxu0 0.0
      %945 = vmatprep.subr.mxu0 0.0
      %946 = vmatpush1.msra.mxu0 0.0
      %947 = vmatprep.subr.mxu0 0.0
      %948 = vmatpush1.msra.mxu0 0.0
      %949 = vmatprep.subr.mxu0 0.0
      %950 = vmatpush1.msra.mxu0 0.0
      %951 = vmatprep.subr.mxu0 0.0
      %952 = vmatpush1.msra.mxu0 0.0
      %953 = vmatprep.subr.mxu0 0.0
      %954 = vmatpush1.msra.mxu0 0.0
      %955 = vmatprep.subr.mxu0 0.0
      %956 = vmatpush1.msra.mxu0 0.0
      %957 = vmatprep.subr.mxu0 0.0
      %958 = vmatpush1.msra.mxu0 0.0
      %959 = vmatprep.subr.mxu0 0.0
      %960 = vmatpush1.msra.mxu0 0.0
      %961 = vmatprep.subr.mxu0 0.0
      %962 = vmatpush1.msra.mxu0 0.0
      %963 = vmatprep.subr.mxu0 0.0
      %964 = vmatpush1.msra.mxu0 0.0
      %965 = vmatprep.subr.mxu0 0.0
      %966 = vmatpush1.msra.mxu0 0.0
      %967 = vmatprep.subr.mxu0 0.0
      %968 = vmatpush1.msra.mxu0 0.0
      %969 = vmatprep.subr.mxu0 0.0
      %970 = vmatpush1.msra.mxu0 0.0
      %971 = vmatprep.subr.mxu0 0.0
      %972 = vmatpush1.msra.mxu0 0.0
      %973 = vmatprep.subr.mxu0 0.0
      %974 = vmatpush1.msra.mxu0 0.0
      %975 = vmatprep.subr.mxu0 0.0
      %976 = vmatpush1.msra.mxu0 0.0
      %977 = vmatprep.subr.mxu0 0.0
      %978 = vmatpush1.msra.mxu0 0.0
      %979 = vmatprep.subr.mxu0 0.0
      %980 = vmatpush1.msra.mxu0 0.0
      %981 = vmatprep.subr.mxu0 0.0
      %982 = vmatpush1.msra.mxu0 0.0
      %983 = vmatprep.subr.mxu0 0.0
      %984 = vmatpush1.msra.mxu0 0.0
      %985 = vmatprep.subr.mxu0 0.0
      %986 = vmatpush1.msra.mxu0 0.0
      %987 = vmatprep.subr.mxu0 0.0
      %988 = vmatpush1.msra.mxu0 0.0
      %989 = vmatprep.subr.mxu0 0.0
      %990 = vmatpush1.msra.mxu0 0.0
      %991 = vmatprep.mubr.f32.mxu0 0.0
      %992 = vmatmul.mubr.f32.gmra.mrb[0].mxu0 %v922
      %v993 = vpop.f32.mrb[0].mxu0
      %v994 = vadd.f32 %v919, %v993
      %v995 = vpop.f32.mrb[0].mxu0
      %996 = vmatprep.mubr.f32.mxu0 0.0
      %997 = vmatmul.mubr.f32.gmra.mrb[0].mxu0 %v925
      %v998 = vpop.f32.mrb[0].mxu0
      %v999 = vadd.f32 %v919, %v998
      %v1000 = vpop.f32.mrb[0].mxu0
      %1001 = vdwg.mxu0
      %v1002 = vmax.f32 %v994, 0.0
      %v1003 = vmax.f32 %v999, 0.0
      %v1004 = vadd.f32 %v1002, %v333
      %v1005 = vadd.f32 %v1003, %v334
      %1006 = vst [vmem:[%s332] sm:$0xff] %v1004
      %1007 = vst [vmem:[%s332 + $0x8] sm:$0xff] %v1005
      %p1008 = scmp.lt.s32.totalorder %s20, 1
      %s1009 = scalar_select %p1008, %s20, 1
      %s1010 = smul.addr %s1009, 2
      %s1011 = smul.addr %s1010, 8
      %s1012 = scalar_lea.vmem %s9, %s1011
      // Predicated region
      $region57: #{dab_module_forward.1} parent=55 // pred_check
        %p1013 = pneg %p232
      $region58: #{dab_module_forward.1} parent=55 // pred_check_branch
        %1015 = sbr.rel (%p1013) target = $region60
      $region59: #{dab_module_forward.1} parent=55 // pred_region
        _
      $region60: #{dab_module_forward.1} parent=55 // pred_fallthru
        _
    $region56: #{dab_module_forward.1} parent=5 // pred_fallthru
      _
    %p1016 = scmp.le.s32.totalorder 2, %s15
    // Predicated region
    $region61: #{dab_module_forward.1} parent=5 // pred_check
      %p1017 = pneg %p1016
    $region62: #{dab_module_forward.1} parent=5 // pred_check_branch
      %1019 = sbr.rel (%p1017) target = $region64
    $region63: #{dab_module_forward.1} parent=5 // pred_region
      %s1020 = ssub.s32 %s15, 2
      // Predicated region
      $region65: #{dab_module_forward.1} parent=63 // pred_check
        %p1021 = pneg %p238
      $region66: #{dab_module_forward.1} parent=63 // pred_check_branch
        %1023 = sbr.rel (%p1021) target = $region68
      $region67: #{dab_module_forward.1} parent=63 // pred_region
        %p1024 = scmp.lt.s32.totalorder %s21, 1
        %s1025 = scalar_select %p1024, %s21, 1
        %s1026 = smul.addr %s1025, 2
        %s1027 = smul.addr %s1026, 8
        %s1028 = scalar_lea.vmem %s9, %s1027
      $region68: #{dab_module_forward.1} parent=63 // pred_fallthru
        _
    $region64: #{dab_module_forward.1} parent=5 // pred_fallthru
      _
  $region6: #{dab_module_forward.1} parent=0 // loop_footer
    %s19 = sadd.s32 1, %s15
  $region7: #{dab_module_forward.1} parent=0 // loop_footer_branch
    %14 = sbr.rel target = $region3
  $region8: #{dab_module_forward.1} parent=0 // loop_exit
    _

</llo_original>
